<compile_context>
chip_gen: v7x
topology: tpu7x:2x2x1
jax: 0.10.0
libtpu: 0.0.40
codegen_flags: <defaults>
</compile_context>

<pallas_src>
from functools import partial

import jax
import jax.numpy as jnp
from jax.experimental import pallas as pl
from jax.experimental.pallas import tpu as pltpu


def _round_up(x, m):
    return (x + m - 1) // m * m


def _pick_tile(m, cap=1024):
    """Rows per grid step: large enough to amortize ~0.35us/step overhead,
    but at least 2 grid steps when m allows so both v7x TensorCores get work."""
    t = _round_up(max(pl.cdiv(m, 2), 1), 16)
    return max(16, min(cap, t))


_COMPILER_PARAMS = pltpu.CompilerParams(
    dimension_semantics=("parallel",),
    # Per-step footprint is only a few MiB (see row caps below), so 32 MiB is
    # never binding yet safe on v5e (16 MiB default) and v7x (64 MiB physical).
    vmem_limit_bytes=32 * 1024 * 1024,
)


# ------------------------------ Pallas kernels ------------------------------

def _conv_relu_pool_kernel(p_ref, w_ref, b_ref, o_ref):
    """Fused conv + 2x2 maxpool + bias + ReLU.

    p_ref: (4, tm, Kp) -- im2col patches of the four pooling phases, same
    pooled output pixel per row across the four slabs.  One matmul over the
    collapsed (4*tm, Kp) block, then an elementwise max over the four tm-row
    slabs, then a single bias+ReLU epilogue (max commutes with +b and ReLU).
    """
    n_phase, tm, kp = p_ref.shape
    z = jnp.dot(p_ref[...].reshape(n_phase * tm, kp), w_ref[...],
                preferred_element_type=jnp.float32)          # (4*tm, OCp) f32
    pooled = z[:tm]
    for ph in range(1, n_phase):
        pooled = jnp.maximum(pooled, z[ph * tm:(ph + 1) * tm])
    o_ref[...] = jnp.maximum(pooled + b_ref[...], 0.0).astype(o_ref.dtype)


def _mlp_head_kernel(x_ref, w1_ref, b1_ref, w2_ref, b2_ref, o_ref, *, classes):
    """fc1 + ReLU + fc2 + LogSoftmax fused (padded logit columns masked)."""
    h = jnp.dot(x_ref[...], w1_ref[...], preferred_element_type=jnp.float32)
    h = jnp.maximum(h + b1_ref[...], 0.0)
    z = jnp.dot(h.astype(w2_ref.dtype), w2_ref[...],
                preferred_element_type=jnp.float32) + b2_ref[...]
    # Mask the zero-padded logit columns out of the logsumexp.
    col = jax.lax.broadcasted_iota(jnp.int32, z.shape, dimension=1)
    zm = jnp.where(col < classes, z, -jnp.inf)
    m = jnp.max(zm, axis=1, keepdims=True)
    lse = jnp.log(jnp.sum(jnp.exp(zm - m), axis=1, keepdims=True)) + m
    o_ref[...] = (z - lse).astype(o_ref.dtype)


# ------------------------------ wrappers ------------------------------------

def conv_relu_pool(x, w, b):
    """x: (B, H, W, C) NHWC.  w: (OC, C, KH, KW) (PyTorch layout).  b: (OC,).

    Returns maxpool2x2(relu(conv_valid(x, w) + b)) as (B, PH, PW, OC) bf16.
    """
    B, H, W, C = x.shape
    OC, _, KH, KW = w.shape
    OH, OW = H - KH + 1, W - KW + 1
    PH, PW = OH // 2, OW // 2            # MaxPool2d(2,2) floor behaviour

    K = KH * KW * C
    Kp = _round_up(K, 128)               # lane-dense K
    OCp = _round_up(OC, 128)             # lane-dense N
    M = B * PH * PW
    # Cap rows so the (4, tm, Kp) bf16 block stays <= ~4 MiB per buffer.
    row_cap = max(16, ((4 << 20) // (Kp * 8)) // 16 * 16)
    tm = _pick_tile(M, cap=min(1024, row_cap))
    Mp = _round_up(M, tm)

    # im2col for the four 2x2-pool phases, stacked into one (4, Mp, Kp) tensor
    # (XLA glue; bf16 to halve bytes).  K ordered (kh, kw, c).
    # TODO(synk): build these patches in-kernel from the raw NHWC activation.
    xb = x.astype(jnp.bfloat16)
    phases = []
    for d in range(2):
        for e in range(2):
            cols = [xb[:, d + i:d + i + 2 * PH:2, e + j:e + j + 2 * PW:2, :]
                    for i in range(KH) for j in range(KW)]
            phases.append(jnp.concatenate(cols, axis=-1).reshape(M, K))
    patches = jnp.stack(phases, axis=0)                       # (4, M, K)
    patches = jnp.pad(patches, ((0, 0), (0, Mp - M), (0, Kp - K)))

    # Weight as (K, OC) with K ordered (kh, kw, c) to match the patch layout.
    wm = jnp.transpose(w, (2, 3, 1, 0)).reshape(K, OC)
    wm = jnp.pad(wm, ((0, Kp - K), (0, OCp - OC))).astype(jnp.bfloat16)
    bm = jnp.pad(b, (0, OCp - OC)).astype(jnp.float32).reshape(1, OCp)

    cost = pl.CostEstimate(
        flops=2 * 4 * Mp * Kp * OCp + 8 * Mp * OCp,
        transcendentals=0,
        bytes_accessed=(4 * Mp * Kp * 2 + Kp * OCp * 2 + 4 * OCp
                        + Mp * OCp * 2))

    out = pl.pallas_call(
        _conv_relu_pool_kernel,
        out_shape=jax.ShapeDtypeStruct((Mp, OCp), jnp.bfloat16),
        grid=(Mp // tm,),
        in_specs=[pl.BlockSpec((4, tm, Kp), lambda i: (0, i, 0)),
                  pl.BlockSpec((Kp, OCp), lambda i: (0, 0)),
                  pl.BlockSpec((1, OCp), lambda i: (0, 0))],
        out_specs=pl.BlockSpec((tm, OCp), lambda i: (i, 0)),
        compiler_params=_COMPILER_PARAMS,
        cost_estimate=cost,
    )(patches, wm, bm)

    return out[:M, :OC].reshape(B, PH, PW, OC)


def mlp_head_logsoftmax(x, w1, b1, w2, b2):
    """log_softmax(relu(x @ w1 + b1) @ w2 + b2) in a single Pallas kernel."""
    B, F = x.shape
    H1 = w1.shape[1]
    classes = w2.shape[1]

    Fp = _round_up(F, 128)
    H1p = _round_up(H1, 128)
    Np = _round_up(classes, 128)
    # Cap rows so the (tb, Fp) bf16 activation block stays <= ~2 MiB per buffer.
    row_cap = max(16, ((2 << 20) // (Fp * 2)) // 16 * 16)
    tb = _pick_tile(B, cap=min(1024, row_cap))
    Bp = _round_up(B, tb)

    # NOTE: bf16 activations + f32 accumulation are fine for inference; keep x
    # in f32 here if these log-probs feed an NLL training loss.
    xp = jnp.pad(x.astype(jnp.bfloat16), ((0, Bp - B), (0, Fp - F)))
    w1p = jnp.pad(w1, ((0, Fp - F), (0, H1p - H1))).astype(jnp.bfloat16)
    b1p = jnp.pad(b1, (0, H1p - H1)).astype(jnp.float32).reshape(1, H1p)
    w2p = jnp.pad(w2, ((0, H1p - H1), (0, Np - classes))).astype(jnp.bfloat16)
    b2p = jnp.pad(b2, (0, Np - classes)).astype(jnp.float32).reshape(1, Np)

    cost = pl.CostEstimate(
        flops=2 * Bp * Fp * H1p + 2 * Bp * H1p * Np + 8 * Bp * Np,
        transcendentals=Bp * Np,
        bytes_accessed=(Bp * Fp * 2 + Fp * H1p * 2 + 4 * H1p
                        + H1p * Np * 2 + 4 * Np + Bp * Np * 4))

    out = pl.pallas_call(
        partial(_mlp_head_kernel, classes=classes),
        out_shape=jax.ShapeDtypeStruct((Bp, Np), jnp.float32),
        grid=(Bp // tb,),
        in_specs=[pl.BlockSpec((tb, Fp), lambda i: (i, 0)),
                  pl.BlockSpec((Fp, H1p), lambda i: (0, 0)),
                  pl.BlockSpec((1, H1p), lambda i: (0, 0)),
                  pl.BlockSpec((H1p, Np), lambda i: (0, 0)),
                  pl.BlockSpec((1, Np), lambda i: (0, 0))],
        out_specs=pl.BlockSpec((tb, Np), lambda i: (i, 0)),
        compiler_params=_COMPILER_PARAMS,
        cost_estimate=cost,
    )(xp, w1p, b1p, w2p, b2p)

    return out[:B, :classes]


# ------------------------------ LeNet ---------------------------------------

def init_lenet_params(key, input_shape, classes):
    """input_shape = (C, H, W), matching the PyTorch module's __init__.
    fc1_w rows are in PyTorch NCHW-flatten order (c, h, w)."""
    C, H, W = input_shape
    conv_out = (H - 5) // 2 + 1            # after conv1 + maxpool1
    conv_out = (conv_out - 5) // 2 + 1     # after conv2 + maxpool2
    conv_size = conv_out * conv_out * 50

    def uni(k, shape, fan_in):
        bound = 1.0 / jnp.sqrt(jnp.float32(fan_in))
        return jax.random.uniform(k, shape, jnp.float32, -bound, bound)

    ks = jax.random.split(key, 8)
    return {
        "conv1_w": uni(ks[0], (20, C, 5, 5), C * 25),
        "conv1_b": uni(ks[1], (20,), C * 25),
        "conv2_w": uni(ks[2], (50, 20, 5, 5), 20 * 25),
        "conv2_b": uni(ks[3], (50,), 20 * 25),
        # stored as (in, out) so kernels do x @ w directly
        "fc1_w": uni(ks[4], (conv_size, 500), conv_size),
        "fc1_b": uni(ks[5], (500,), conv_size),
        "fc2_w": uni(ks[6], (500, classes), 500),
        "fc2_b": uni(ks[7], (classes,), 500),
    }


def prepare_params(params, input_shape):
    """One-time re-layout: permute fc1_w rows from PyTorch NCHW-flatten order
    (c, h, w) to the NHWC-flatten order (h, w, c) the Pallas pipeline emits,
    so the forward pass flattens conv2's output directly (no relayout)."""
    _, H, W = input_shape
    ph1, pw1 = (H - 4) // 2, (W - 4) // 2
    ph2, pw2 = (ph1 - 4) // 2, (pw1 - 4) // 2
    oc = params["conv2_w"].shape[0]
    w1 = params["fc1_w"]
    w1_hwc = jnp.transpose(w1.reshape(oc, ph2, pw2, -1), (1, 2, 0, 3))
    w1_hwc = w1_hwc.reshape(oc * ph2 * pw2, -1)
    out = dict(params)
    out["fc1_w"] = w1_hwc
    return out


def lenet_forward(params, x):
    """x: (B, C, H, W) NCHW (PyTorch convention) -> (B, classes) log-probs.
    `params` must be the prepare_params() version (fc1_w rows in HWC order)."""
    x = jnp.transpose(x, (0, 2, 3, 1))                            # NHWC once
    x = conv_relu_pool(x, params["conv1_w"], params["conv1_b"])   # conv1+relu1+pool1
    x = conv_relu_pool(x, params["conv2_w"], params["conv2_b"])   # conv2+relu2+pool2
    B = x.shape[0]
    feats = x.reshape(B, -1)          # NHWC flatten; fc1_w rows pre-permuted
    return mlp_head_logsoftmax(feats, params["fc1_w"], params["fc1_b"],
                               params["fc2_w"], params["fc2_b"])


# ------------------------------ pure-JAX reference ---------------------------

def lenet_reference(params, x):
    y = jax.lax.conv_general_dilated(
        x, params["conv1_w"], (1, 1), "VALID",
        dimension_numbers=("NCHW", "OIHW", "NCHW"))
    y = jax.nn.relu(y + params["conv1_b"][None, :, None, None])
    y = jax.lax.reduce_window(y, -jnp.inf, jax.lax.max,
                              (1, 1, 2, 2), (1, 1, 2, 2), "VALID")
    y = jax.lax.conv_general_dilated(
        y, params["conv2_w"], (1, 1), "VALID",
        dimension_numbers=("NCHW", "OIHW", "NCHW"))
    y = jax.nn.relu(y + params["conv2_b"][None, :, None, None])
    y = jax.lax.reduce_window(y, -jnp.inf, jax.lax.max,
                              (1, 1, 2, 2), (1, 1, 2, 2), "VALID")
    y = y.reshape(y.shape[0], -1)
    y = jax.nn.relu(y @ params["fc1_w"] + params["fc1_b"])
    z = y @ params["fc2_w"] + params["fc2_b"]
    return jax.nn.log_softmax(z, axis=1)


# ------------------------------ main -----------------------------------------

if __name__ == "__main__":
    key = jax.random.PRNGKey(0)
    k_params, k_x = jax.random.split(key)

    B, C, H, W = 2, 3, 16, 16       # 16x16 spatial -> conv_size = 1*1*50
    classes = 10
    params = init_lenet_params(k_params, (C, H, W), classes)
    kparams = prepare_params(params, (C, H, W))   # one-time fc1_w row permute
    x = jax.random.normal(k_x, (B, C, H, W), dtype=jnp.float32)

    out = jax.jit(lenet_forward)(kparams, x)
    out = jax.block_until_ready(out)

    assert out.shape == (B, classes)
    # log-softmax rows must (log-)sum to ~0
    assert jnp.allclose(jnp.sum(jnp.exp(out), axis=1), 1.0, atol=1e-3)
    # numerics vs. pure-JAX f32 reference (kernel uses bf16 operands)
    ref = lenet_reference(params, x)
    max_err = float(jnp.max(jnp.abs(out - ref)))
    assert max_err < 5e-2, f"mismatch vs reference: {max_err}"

    print("KERNEL_OK")
</pallas_src>

<mosaic_0001>
module attributes {stable_mosaic.version = 11 : i64} {
  func.func @_conv_relu_pool_kernel(%arg0: i32, %arg1: memref<4x48x128xbf16, #tpu.memory_space<vmem>>, %arg2: memref<128x128xbf16, #tpu.memory_space<vmem>>, %arg3: memref<1x128xf32, #tpu.memory_space<vmem>>, %arg4: memref<48x128xbf16, #tpu.memory_space<vmem>>) attributes {dimension_semantics = [#tpu.dimension_semantics<parallel>], iteration_bounds = array<i64: 2>, scalar_prefetch = 0 : i64, scratch_operands = 0 : i64, tpu.core_type = #tpu.core_type<tc>, window_params = [{transform_indices = @transform_0, window_bounds = array<i64: 4, 48, 128>}, {pipeline_mode = #tpu.pipeline_mode<synchronous>, transform_indices = @transform_1, window_bounds = array<i64: 128, 128>}, {pipeline_mode = #tpu.pipeline_mode<synchronous>, transform_indices = @transform_2, window_bounds = array<i64: 1, 128>}, {transform_indices = @transform_3, window_bounds = array<i64: 48, 128>}]} {
    %c0 = arith.constant 0 : index
    %c0_0 = arith.constant 0 : index
    %c0_1 = arith.constant 0 : index
    %0 = vector.load %arg1[%c0, %c0_0, %c0_1] : memref<4x48x128xbf16, #tpu.memory_space<vmem>>, vector<4x48x128xbf16>
    %1 = vector.shape_cast %0 : vector<4x48x128xbf16> to vector<192x128xbf16>
    %c0_2 = arith.constant 0 : index
    %c0_3 = arith.constant 0 : index
    %2 = vector.load %arg2[%c0_2, %c0_3] : memref<128x128xbf16, #tpu.memory_space<vmem>>, vector<128x128xbf16>
    %cst = arith.constant dense<0.000000e+00> : vector<192x128xf32>
    %3 = tpu.matmul %1, %2, %cst {dimension_numbers = #tpu.dot_dimension_numbers<[1], [0], [0], [1], [0, 0, 1, 1], [], []>} : vector<192x128xbf16>, vector<128x128xbf16>, vector<192x128xf32> -> vector<192x128xf32>
    %4 = vector.extract_strided_slice %3 {offsets = [0, 0], sizes = [48, 128], strides = [1, 1]} : vector<192x128xf32> to vector<48x128xf32>
    %5 = vector.extract_strided_slice %3 {offsets = [48, 0], sizes = [48, 128], strides = [1, 1]} : vector<192x128xf32> to vector<48x128xf32>
    %6 = arith.maximumf %4, %5 : vector<48x128xf32>
    %7 = vector.extract_strided_slice %3 {offsets = [96, 0], sizes = [48, 128], strides = [1, 1]} : vector<192x128xf32> to vector<48x128xf32>
    %8 = arith.maximumf %6, %7 : vector<48x128xf32>
    %9 = vector.extract_strided_slice %3 {offsets = [144, 0], sizes = [48, 128], strides = [1, 1]} : vector<192x128xf32> to vector<48x128xf32>
    %10 = arith.maximumf %8, %9 : vector<48x128xf32>
    %c0_4 = arith.constant 0 : index
    %c0_5 = arith.constant 0 : index
    %11 = vector.load %arg3[%c0_4, %c0_5] : memref<1x128xf32, #tpu.memory_space<vmem>>, vector<1x128xf32>
    %12 = vector.broadcast %11 : vector<1x128xf32> to vector<48x128xf32>
    %13 = arith.addf %10, %12 : vector<48x128xf32>
    %cst_6 = arith.constant 0.000000e+00 : f32
    %14 = vector.broadcast %cst_6 : f32 to vector<48x128xf32>
    %15 = arith.maximumf %13, %14 : vector<48x128xf32>
    %16 = arith.truncf %15 : vector<48x128xf32> to vector<48x128xbf16>
    %c0_7 = arith.constant 0 : index
    %c0_8 = arith.constant 0 : index
    %17 = vector.load %arg4[%c0_7, %c0_8] : memref<48x128xbf16, #tpu.memory_space<vmem>>, vector<48x128xbf16>
    tpu.vector_store %arg4[%c0_7, %c0_8], %16 {strides = array<i32>} : memref<48x128xbf16, #tpu.memory_space<vmem>>, vector<48x128xbf16>,
    return
  }
  func.func @transform_0(%arg0: i32) -> (i32, i32, i32) {
    %c0_i32 = arith.constant 0 : i32
    %c0_i32_0 = arith.constant 0 : i32
    %c0_i32_1 = arith.constant 0 : i32
    return %c0_i32, %arg0, %c0_i32_0 : i32, i32, i32
  }
  func.func @transform_1(%arg0: i32) -> (i32, i32) {
    %c0_i32 = arith.constant 0 : i32
    %c0_i32_0 = arith.constant 0 : i32
    %c0_i32_1 = arith.constant 0 : i32
    return %c0_i32, %c0_i32_0 : i32, i32
  }
  func.func @transform_2(%arg0: i32) -> (i32, i32) {
    %c0_i32 = arith.constant 0 : i32
    %c0_i32_0 = arith.constant 0 : i32
    %c0_i32_1 = arith.constant 0 : i32
    return %c0_i32, %c0_i32_0 : i32, i32
  }
  func.func @transform_3(%arg0: i32) -> (i32, i32) {
    %c0_i32 = arith.constant 0 : i32
    %c0_i32_0 = arith.constant 0 : i32
    return %arg0, %c0_i32 : i32, i32
  }
}

module attributes {stable_mosaic.version = 11 : i64} {
  func.func @_conv_relu_pool_kernel(%arg0: i32, %arg1: memref<4x16x512xbf16, #tpu.memory_space<vmem>>, %arg2: memref<512x128xbf16, #tpu.memory_space<vmem>>, %arg3: memref<1x128xf32, #tpu.memory_space<vmem>>, %arg4: memref<16x128xbf16, #tpu.memory_space<vmem>>) attributes {dimension_semantics = [#tpu.dimension_semantics<parallel>], iteration_bounds = array<i64: 1>, scalar_prefetch = 0 : i64, scratch_operands = 0 : i64, tpu.core_type = #tpu.core_type<tc>, window_params = [{transform_indices = @transform_0, window_bounds = array<i64: 4, 16, 512>}, {pipeline_mode = #tpu.pipeline_mode<synchronous>, transform_indices = @transform_1, window_bounds = array<i64: 512, 128>}, {pipeline_mode = #tpu.pipeline_mode<synchronous>, transform_indices = @transform_2, window_bounds = array<i64: 1, 128>}, {transform_indices = @transform_3, window_bounds = array<i64: 16, 128>}]} {
    %c0 = arith.constant 0 : index
    %c0_0 = arith.constant 0 : index
    %c0_1 = arith.constant 0 : index
    %0 = vector.load %arg1[%c0, %c0_0, %c0_1] : memref<4x16x512xbf16, #tpu.memory_space<vmem>>, vector<4x16x512xbf16>
    %1 = vector.shape_cast %0 : vector<4x16x512xbf16> to vector<64x512xbf16>
    %c0_2 = arith.constant 0 : index
    %c0_3 = arith.constant 0 : index
    %2 = vector.load %arg2[%c0_2, %c0_3] : memref<512x128xbf16, #tpu.memory_space<vmem>>, vector<512x128xbf16>
    %cst = arith.constant dense<0.000000e+00> : vector<64x128xf32>
    %3 = tpu.matmul %1, %2, %cst {dimension_numbers = #tpu.dot_dimension_numbers<[1], [0], [0], [1], [0, 0, 1, 1], [], []>} : vector<64x512xbf16>, vector<512x128xbf16>, vector<64x128xf32> -> vector<64x128xf32>
    %4 = vector.extract_strided_slice %3 {offsets = [0, 0], sizes = [16, 128], strides = [1, 1]} : vector<64x128xf32> to vector<16x128xf32>
    %5 = vector.extract_strided_slice %3 {offsets = [16, 0], sizes = [16, 128], strides = [1, 1]} : vector<64x128xf32> to vector<16x128xf32>
    %6 = arith.maximumf %4, %5 : vector<16x128xf32>
    %7 = vector.extract_strided_slice %3 {offsets = [32, 0], sizes = [16, 128], strides = [1, 1]} : vector<64x128xf32> to vector<16x128xf32>
    %8 = arith.maximumf %6, %7 : vector<16x128xf32>
    %9 = vector.extract_strided_slice %3 {offsets = [48, 0], sizes = [16, 128], strides = [1, 1]} : vector<64x128xf32> to vector<16x128xf32>
    %10 = arith.maximumf %8, %9 : vector<16x128xf32>
    %c0_4 = arith.constant 0 : index
    %c0_5 = arith.constant 0 : index
    %11 = vector.load %arg3[%c0_4, %c0_5] : memref<1x128xf32, #tpu.memory_space<vmem>>, vector<1x128xf32>
    %12 = vector.broadcast %11 : vector<1x128xf32> to vector<16x128xf32>
    %13 = arith.addf %10, %12 : vector<16x128xf32>
    %cst_6 = arith.constant 0.000000e+00 : f32
    %14 = vector.broadcast %cst_6 : f32 to vector<16x128xf32>
    %15 = arith.maximumf %13, %14 : vector<16x128xf32>
    %16 = arith.truncf %15 : vector<16x128xf32> to vector<16x128xbf16>
    %c0_7 = arith.constant 0 : index
    %c0_8 = arith.constant 0 : index
    %17 = vector.load %arg4[%c0_7, %c0_8] : memref<16x128xbf16, #tpu.memory_space<vmem>>, vector<16x128xbf16>
    tpu.vector_store %arg4[%c0_7, %c0_8], %16 {strides = array<i32>} : memref<16x128xbf16, #tpu.memory_space<vmem>>, vector<16x128xbf16>,
    return
  }
  func.func @transform_0(%arg0: i32) -> (i32, i32, i32) {
    %c0_i32 = arith.constant 0 : i32
    %c0_i32_0 = arith.constant 0 : i32
    %c0_i32_1 = arith.constant 0 : i32
    return %c0_i32, %arg0, %c0_i32_0 : i32, i32, i32
  }
  func.func @transform_1(%arg0: i32) -> (i32, i32) {
    %c0_i32 = arith.constant 0 : i32
    %c0_i32_0 = arith.constant 0 : i32
    %c0_i32_1 = arith.constant 0 : i32
    return %c0_i32, %c0_i32_0 : i32, i32
  }
  func.func @transform_2(%arg0: i32) -> (i32, i32) {
    %c0_i32 = arith.constant 0 : i32
    %c0_i32_0 = arith.constant 0 : i32
    %c0_i32_1 = arith.constant 0 : i32
    return %c0_i32, %c0_i32_0 : i32, i32
  }
  func.func @transform_3(%arg0: i32) -> (i32, i32) {
    %c0_i32 = arith.constant 0 : i32
    %c0_i32_0 = arith.constant 0 : i32
    return %arg0, %c0_i32 : i32, i32
  }
}

module attributes {stable_mosaic.version = 11 : i64} {
  func.func @_mlp_head_kernel(%arg0: i32, %arg1: memref<16x128xbf16, #tpu.memory_space<vmem>>, %arg2: memref<128x512xbf16, #tpu.memory_space<vmem>>, %arg3: memref<1x512xf32, #tpu.memory_space<vmem>>, %arg4: memref<512x128xbf16, #tpu.memory_space<vmem>>, %arg5: memref<1x128xf32, #tpu.memory_space<vmem>>, %arg6: memref<16x128xf32, #tpu.memory_space<vmem>>) attributes {dimension_semantics = [#tpu.dimension_semantics<parallel>], iteration_bounds = array<i64: 1>, scalar_prefetch = 0 : i64, scratch_operands = 0 : i64, tpu.core_type = #tpu.core_type<tc>, window_params = [{transform_indices = @transform_0, window_bounds = array<i64: 16, 128>}, {pipeline_mode = #tpu.pipeline_mode<synchronous>, transform_indices = @transform_1, window_bounds = array<i64: 128, 512>}, {pipeline_mode = #tpu.pipeline_mode<synchronous>, transform_indices = @transform_2, window_bounds = array<i64: 1, 512>}, {pipeline_mode = #tpu.pipeline_mode<synchronous>, transform_indices = @transform_3, window_bounds = array<i64: 512, 128>}, {pipeline_mode = #tpu.pipeline_mode<synchronous>, transform_indices = @transform_4, window_bounds = array<i64: 1, 128>}, {transform_indices = @transform_5, window_bounds = array<i64: 16, 128>}]} {
    %c0 = arith.constant 0 : index
    %c0_0 = arith.constant 0 : index
    %0 = vector.load %arg1[%c0, %c0_0] : memref<16x128xbf16, #tpu.memory_space<vmem>>, vector<16x128xbf16>
    %c0_1 = arith.constant 0 : index
    %c0_2 = arith.constant 0 : index
    %1 = vector.load %arg2[%c0_1, %c0_2] : memref<128x512xbf16, #tpu.memory_space<vmem>>, vector<128x512xbf16>
    %cst = arith.constant dense<0.000000e+00> : vector<16x512xf32>
    %2 = tpu.matmul %0, %1, %cst {dimension_numbers = #tpu.dot_dimension_numbers<[1], [0], [0], [1], [0, 0, 1, 1], [], []>} : vector<16x128xbf16>, vector<128x512xbf16>, vector<16x512xf32> -> vector<16x512xf32>
    %c0_3 = arith.constant 0 : index
    %c0_4 = arith.constant 0 : index
    %3 = vector.load %arg3[%c0_3, %c0_4] : memref<1x512xf32, #tpu.memory_space<vmem>>, vector<1x512xf32>
    %4 = vector.broadcast %3 : vector<1x512xf32> to vector<16x512xf32>
    %5 = arith.addf %2, %4 : vector<16x512xf32>
    %cst_5 = arith.constant 0.000000e+00 : f32
    %6 = vector.broadcast %cst_5 : f32 to vector<16x512xf32>
    %7 = arith.maximumf %5, %6 : vector<16x512xf32>
    %8 = arith.truncf %7 : vector<16x512xf32> to vector<16x512xbf16>
    %c0_6 = arith.constant 0 : index
    %c0_7 = arith.constant 0 : index
    %9 = vector.load %arg4[%c0_6, %c0_7] : memref<512x128xbf16, #tpu.memory_space<vmem>>, vector<512x128xbf16>
    %cst_8 = arith.constant dense<0.000000e+00> : vector<16x128xf32>
    %10 = tpu.matmul %8, %9, %cst_8 {dimension_numbers = #tpu.dot_dimension_numbers<[1], [0], [0], [1], [0, 0, 1, 1], [], []>} : vector<16x512xbf16>, vector<512x128xbf16>, vector<16x128xf32> -> vector<16x128xf32>
    %c0_9 = arith.constant 0 : index
    %c0_10 = arith.constant 0 : index
    %11 = vector.load %arg5[%c0_9, %c0_10] : memref<1x128xf32, #tpu.memory_space<vmem>>, vector<1x128xf32>
    %12 = vector.broadcast %11 : vector<1x128xf32> to vector<16x128xf32>
    %13 = arith.addf %10, %12 : vector<16x128xf32>
    %14 = tpu.iota {dimensions = array<i32: 1>} : vector<16x128xi32>
    %c10_i32 = arith.constant 10 : i32
    %15 = vector.broadcast %c10_i32 : i32 to vector<16x128xi32>
    %16 = arith.cmpi slt, %14, %15 : vector<16x128xi32>
    %cst_11 = arith.constant 0xFF800000 : f32
    %17 = vector.broadcast %cst_11 : f32 to vector<16x128xf32>
    %18 = arith.select %16, %13, %17 : vector<16x128xi1>, vector<16x128xf32>
    %cst_12 = arith.constant dense<0xFF800000> : vector<16xf32>
    %19 = vector.multi_reduction <maximumf>, %18, %cst_12 [1] : vector<16x128xf32> to vector<16xf32>
    %20 = vector.shape_cast %19 : vector<16xf32> to vector<16x1xf32>
    %21 = vector.broadcast %20 : vector<16x1xf32> to vector<16x128xf32>
    %22 = arith.subf %18, %21 : vector<16x128xf32>
    %23 = math.exp %22 : vector<16x128xf32>
    %cst_13 = arith.constant dense<0.000000e+00> : vector<16xf32>
    %24 = vector.multi_reduction <add>, %23, %cst_13 [1] : vector<16x128xf32> to vector<16xf32>
    %25 = vector.shape_cast %24 : vector<16xf32> to vector<16x1xf32>
    %26 = math.log %25 : vector<16x1xf32>
    %27 = arith.addf %26, %20 : vector<16x1xf32>
    %28 = vector.broadcast %27 : vector<16x1xf32> to vector<16x128xf32>
    %29 = arith.subf %13, %28 : vector<16x128xf32>
    %c0_14 = arith.constant 0 : index
    %c0_15 = arith.constant 0 : index
    %30 = vector.load %arg6[%c0_14, %c0_15] : memref<16x128xf32, #tpu.memory_space<vmem>>, vector<16x128xf32>
    tpu.vector_store %arg6[%c0_14, %c0_15], %29 {strides = array<i32>} : memref<16x128xf32, #tpu.memory_space<vmem>>, vector<16x128xf32>,
    return
  }
  func.func @transform_0(%arg0: i32) -> (i32, i32) {
    %c0_i32 = arith.constant 0 : i32
    %c0_i32_0 = arith.constant 0 : i32
    return %arg0, %c0_i32 : i32, i32
  }
  func.func @transform_1(%arg0: i32) -> (i32, i32) {
    %c0_i32 = arith.constant 0 : i32
    %c0_i32_0 = arith.constant 0 : i32
    %c0_i32_1 = arith.constant 0 : i32
    return %c0_i32, %c0_i32_0 : i32, i32
  }
  func.func @transform_2(%arg0: i32) -> (i32, i32) {
    %c0_i32 = arith.constant 0 : i32
    %c0_i32_0 = arith.constant 0 : i32
    %c0_i32_1 = arith.constant 0 : i32
    return %c0_i32, %c0_i32_0 : i32, i32
  }
  func.func @transform_3(%arg0: i32) -> (i32, i32) {
    %c0_i32 = arith.constant 0 : i32
    %c0_i32_0 = arith.constant 0 : i32
    %c0_i32_1 = arith.constant 0 : i32
    return %c0_i32, %c0_i32_0 : i32, i32
  }
  func.func @transform_4(%arg0: i32) -> (i32, i32) {
    %c0_i32 = arith.constant 0 : i32
    %c0_i32_0 = arith.constant 0 : i32
    %c0_i32_1 = arith.constant 0 : i32
    return %c0_i32, %c0_i32_0 : i32, i32
  }
  func.func @transform_5(%arg0: i32) -> (i32, i32) {
    %c0_i32 = arith.constant 0 : i32
    %c0_i32_0 = arith.constant 0 : i32
    return %arg0, %c0_i32 : i32, i32
  }
}

</mosaic_0001>

<llo_original>
// kernel: lenet_forward.3
$region0: #{lenet_forward.3}
  #allocation0 [shape = 'u32[]', space=smem, size = 0x4, offset = 0x4, fixed_abs, tag = 'smem constant byte address 0x4 - core index']
  #allocation1 [shape = 'u32[144,128]{1,0:T(1,128)}', space=vmem, size = 0x12000, scoped, tag = 'internal scratch']
  %s0 = inlined_call_operand.vmem [shape: bf16[4,96,128], index: 0, kind: input, shape index: {}]
  %s1 = inlined_call_operand.vmem [shape: bf16[128,128], index: 1, kind: input, shape index: {}]
  %s2 = inlined_call_operand.vmem [shape: f32[1,128], index: 2, kind: input, shape index: {}]
  %s3 = inlined_call_operand.vmem [shape: bf16[96,128], index: 3, kind: output, shape index: {}]
  %s4 = sld [smem:[#allocation0]]
  $region86: #{lenet_forward.3} parent=0
    _
  %s6 = ssub.s32 1, %s4
  %s7 = scalar_select 0, %s6, %s4
  $region1: #{lenet_forward.3} parent=0
    #allocation2 [shape = 'u8[98304]{0}', space=vmem, size = 0x18000, scoped, tag = 'input window, operand 0']
    loop: start=0, step=1, limit=4
    $region2: #{lenet_forward.3} parent=1 // loop_pre_header
      _
    $region3: #{lenet_forward.3} parent=1 // loop_header
      %s9 = sphi 0, %s13
      %p10 = scmp.ge.s32.totalorder %s9, 4
      %s19 = sphi 0, %s21
      %s22 = sphi 0, %s19
      %s23 = sphi 0, %s22
      %s39 = sphi 0, %s23
      %s43 = sphi 0, %s43
      %s45 = sphi 0, %s43
      %s46 = sphi 0, %s45
      %s60 = sphi 0, %s46
      %s64 = sphi 0, %s64
      %s66 = sphi 0, %s64
      %s67 = sphi 0, %s66
      %s81 = sphi 0, %s67
      %s87 = sphi 0, %s89
      %s90 = sphi 0, %s87
      %s91 = sphi 0, %s90
      %s107 = sphi 0, %s91
    $region4: #{lenet_forward.3} parent=1 // loop_header_branch
      %12 = sbr.rel (%p10) target = $region8
    $region5: #{lenet_forward.3} parent=1 // loop_body
      %s14 = ssub.s32 %s9, 1
      %s15 = ssub.s32 %s9, 2
      %s16 = sadd.s32 %s9, 1
      %s17 = ssub.s32 %s9, %s16
      %p18 = scmp.eq.s32.totalorder %s17, 0
      %s20 = sadd.s32 %s19, 1
      %s21 = scalar_select %p18, %s19, %s20
      %p24 = pneg %p18
      %p25 = scmp.eq.s32.totalorder %s9, 1
      %p26 = por %p24, %p25
      %p27 = scmp.ne.s32.totalorder %s19, %s22
      %p28 = scmp.eq.s32.totalorder %s9, 0
      %p29 = por %p27, %p28
      %p30 = scmp.ne.s32.totalorder %s19, %s22
      %p31 = scmp.eq.s32.totalorder %s14, 1
      %p32 = por %p30, %p31
      %p33 = scmp.ne.s32.totalorder %s22, %s23
      %p34 = scmp.eq.s32.totalorder %s14, 0
      %p35 = por %p33, %p34
      %p36 = scmp.ne.s32.totalorder %s22, %s23
      %p37 = scmp.eq.s32.totalorder %s15, 1
      %p38 = por %p36, %p37
      %p40 = scmp.ne.s32.totalorder %s23, %s39
      %p41 = scmp.eq.s32.totalorder %s15, 0
      %p42 = por %p40, %p41
      %s44 = sadd.s32 %s43, 1
      %p47 = scmp.eq.s32.totalorder %s9, 1
      %p48 = scmp.ne.s32.totalorder %s43, %s45
      %p49 = scmp.eq.s32.totalorder %s9, 0
      %p50 = por %p48, %p49
      %p51 = scmp.ne.s32.totalorder %s43, %s45
      %p52 = scmp.eq.s32.totalorder %s14, 1
      %p53 = por %p51, %p52
      %p54 = scmp.ne.s32.totalorder %s45, %s46
      %p55 = scmp.eq.s32.totalorder %s14, 0
      %p56 = por %p54, %p55
      %p57 = scmp.ne.s32.totalorder %s45, %s46
      %p58 = scmp.eq.s32.totalorder %s15, 1
      %p59 = por %p57, %p58
      %p61 = scmp.ne.s32.totalorder %s46, %s60
      %p62 = scmp.eq.s32.totalorder %s15, 0
      %p63 = por %p61, %p62
      %s65 = sadd.s32 %s64, 1
      %p68 = scmp.eq.s32.totalorder %s9, 1
      %p69 = scmp.ne.s32.totalorder %s64, %s66
      %p70 = scmp.eq.s32.totalorder %s9, 0
      %p71 = por %p69, %p70
      %p72 = scmp.ne.s32.totalorder %s64, %s66
      %p73 = scmp.eq.s32.totalorder %s14, 1
      %p74 = por %p72, %p73
      %p75 = scmp.ne.s32.totalorder %s66, %s67
      %p76 = scmp.eq.s32.totalorder %s14, 0
      %p77 = por %p75, %p76
      %p78 = scmp.ne.s32.totalorder %s66, %s67
      %p79 = scmp.eq.s32.totalorder %s15, 1
      %p80 = por %p78, %p79
      %p82 = scmp.ne.s32.totalorder %s67, %s81
      %p83 = scmp.eq.s32.totalorder %s15, 0
      %p84 = por %p82, %p83
      %s85 = ssub.s32 %s9, %s16
      %p86 = scmp.eq.s32.totalorder %s85, 0
      %s88 = sadd.s32 %s87, 1
      %s89 = scalar_select %p86, %s87, %s88
      %p92 = pneg %p86
      %p93 = scmp.eq.s32.totalorder %s9, 1
      %p94 = por %p92, %p93
      %p95 = scmp.ne.s32.totalorder %s87, %s90
      %p96 = scmp.eq.s32.totalorder %s9, 0
      %p97 = por %p95, %p96
      %p98 = scmp.ne.s32.totalorder %s87, %s90
      %p99 = scmp.eq.s32.totalorder %s14, 1
      %p100 = por %p98, %p99
      %p101 = scmp.ne.s32.totalorder %s90, %s91
      %p102 = scmp.eq.s32.totalorder %s14, 0
      %p103 = por %p101, %p102
      %p104 = scmp.ne.s32.totalorder %s90, %s91
      %p105 = scmp.eq.s32.totalorder %s15, 1
      %p106 = por %p104, %p105
      %p108 = scmp.ne.s32.totalorder %s91, %s107
      %p109 = scmp.eq.s32.totalorder %s15, 0
      %p110 = por %p108, %p109
      %p111 = scmp.le.s32.totalorder 1, %s9
      %p112 = scmp.lt.s32.totalorder %s9, 3
      %p113 = pnand %p111, %p112
      %p114 = pneg %p113
      // Predicated region
      $region9: #{lenet_forward.3} parent=5 // pred_check
        _
      $region10: #{lenet_forward.3} parent=5 // pred_check_branch
        %116 = sbr.rel (%p113) target = $region12
      $region11: #{lenet_forward.3} parent=5 // pred_region
        %s117 = ssub.s32 %s9, 1
        // Predicated region
        $region13: #{lenet_forward.3} parent=11 // pred_check
          %p118 = pneg %p56
        $region14: #{lenet_forward.3} parent=11 // pred_check_branch
          %120 = sbr.rel (%p118) target = $region16
        $region15: #{lenet_forward.3} parent=11 // pred_region
          _
        $region16: #{lenet_forward.3} parent=11 // pred_fallthru
          _
        // Predicated region
        $region17: #{lenet_forward.3} parent=11 // pred_check
          %p121 = pneg %p77
        $region18: #{lenet_forward.3} parent=11 // pred_check_branch
          %123 = sbr.rel (%p121) target = $region20
        $region19: #{lenet_forward.3} parent=11 // pred_region
          _
        $region20: #{lenet_forward.3} parent=11 // pred_fallthru
          _
      $region12: #{lenet_forward.3} parent=5 // pred_fallthru
        _
      %p124 = scmp.lt.s32.totalorder %s9, 2
      // Predicated region
      $region21: #{lenet_forward.3} parent=5 // pred_check
        %p125 = pneg %p124
      $region22: #{lenet_forward.3} parent=5 // pred_check_branch
        %127 = sbr.rel (%p125) target = $region24
      $region23: #{lenet_forward.3} parent=5 // pred_region
        // Predicated region
        $region25: #{lenet_forward.3} parent=23 // pred_check
          %p128 = pneg %p29
        $region26: #{lenet_forward.3} parent=23 // pred_check_branch
          %130 = sbr.rel (%p128) target = $region28
        $region27: #{lenet_forward.3} parent=23 // pred_region
          %s131 = sand.u32 %s19, 1
          %s132 = sand.u32 %s19, 1
          %s133 = smul.addr %s132, 96
          %s134 = scalar_lea.vmem [#allocation2], %s133
          %s135 = smul.u32 6, %s9
          %s136 = smul.addr %s135, 4
          %s137 = scalar_lea.vmem %s0, %s136
          // Predicated region
          $region29: #{lenet_forward.3} parent=27 // pred_check
            _
          $region30: #{lenet_forward.3} parent=27 // pred_check_branch
            %139 = sbr.rel (0) target = $region32
          $region31: #{lenet_forward.3} parent=27 // pred_region
            // Predicated region
            $region33: #{lenet_forward.3} parent=31 // pred_check
              _
            $region34: #{lenet_forward.3} parent=31 // pred_check_branch
              %141 = sbr.rel target = $region36
            $region35: #{lenet_forward.3} parent=31 // pred_region
              // Predicated region
              $region48: #{lenet_forward.3} parent=35 // pred_check
                _
              $region49: #{lenet_forward.3} parent=35 // pred_check_branch
                %202 = sbr.rel (0) target = $region51
              $region50: #{lenet_forward.3} parent=35 // pred_region
                loop: start=0, step=1, limit=1
                $region52: #{lenet_forward.3} parent=50 // loop_pre_header
                  _
                $region53: #{lenet_forward.3} parent=50 // loop_header
                  %s204 = sphi 0, %s208
                  %p205 = scmp.ge.s32.totalorder %s204, 1
                  %s209 = sphi %s137, %s137
                  %s210 = sphi %s134, %s134
                $region54: #{lenet_forward.3} parent=50 // loop_header_branch
                  %207 = sbr.rel (%p205) target = $region58
                $region55: #{lenet_forward.3} parent=50 // loop_body
                  _
                $region56: #{lenet_forward.3} parent=50 // loop_footer
                  %s208 = sadd.s32 1, %s204
                $region57: #{lenet_forward.3} parent=50 // loop_footer_branch
                  %203 = sbr.rel target = $region53
                $region58: #{lenet_forward.3} parent=50 // loop_exit
                  _
                loop: start=0, step=1, limit=1
                $region59: #{lenet_forward.3} parent=50 // loop_pre_header
                  _
                $region60: #{lenet_forward.3} parent=50 // loop_header
                  %s213 = sphi 0, %s217
                  %p214 = scmp.ge.s32.totalorder %s213, 1
                  %s218 = sphi %s137, %s137
                  %s219 = sphi %s134, %s134
                $region61: #{lenet_forward.3} parent=50 // loop_header_branch
                  %216 = sbr.rel (%p214) target = $region65
                $region62: #{lenet_forward.3} parent=50 // loop_body
                  %v220 = vld [vmem:[%s218] sm:$0xf]
                  %221 = vst [vmem:[%s219] sm:$0xf] %v220
                  %v222 = vld [vmem:[%s218 + $0x4] sm:$0xf]
                  %223 = vst [vmem:[%s219 + $0x4] sm:$0xf] %v222
                  %v224 = vld [vmem:[%s218 + $0x8] sm:$0xf]
                  %225 = vst [vmem:[%s219 + $0x8] sm:$0xf] %v224
                  %v226 = vld [vmem:[%s218 + $0xc] sm:$0xf]
                  %227 = vst [vmem:[%s219 + $0xc] sm:$0xf] %v226
                  %v228 = vld [vmem:[%s218 + $0x10] sm:$0xf]
                  %229 = vst [vmem:[%s219 + $0x10] sm:$0xf] %v228
                  %v230 = vld [vmem:[%s218 + $0x14] sm:$0xf]
                  %231 = vst [vmem:[%s219 + $0x14] sm:$0xf] %v230
                  %v232 = vld [vmem:[%s218 + $0x30] sm:$0xf]
                  %233 = vst [vmem:[%s219 + $0x18] sm:$0xf] %v232
                  %v234 = vld [vmem:[%s218 + $0x34] sm:$0xf]
                  %235 = vst [vmem:[%s219 + $0x1c] sm:$0xf] %v234
                  %v236 = vld [vmem:[%s218 + $0x38] sm:$0xf]
                  %237 = vst [vmem:[%s219 + $0x20] sm:$0xf] %v236
                  %v238 = vld [vmem:[%s218 + $0x3c] sm:$0xf]
                  %239 = vst [vmem:[%s219 + $0x24] sm:$0xf] %v238
                  %v240 = vld [vmem:[%s218 + $0x40] sm:$0xf]
                  %241 = vst [vmem:[%s219 + $0x28] sm:$0xf] %v240
                  %v242 = vld [vmem:[%s218 + $0x44] sm:$0xf]
                  %243 = vst [vmem:[%s219 + $0x2c] sm:$0xf] %v242
                  %v244 = vld [vmem:[%s218 + $0x60] sm:$0xf]
                  %245 = vst [vmem:[%s219 + $0x30] sm:$0xf] %v244
                  %v246 = vld [vmem:[%s218 + $0x64] sm:$0xf]
                  %247 = vst [vmem:[%s219 + $0x34] sm:$0xf] %v246
                  %v248 = vld [vmem:[%s218 + $0x68] sm:$0xf]
                  %249 = vst [vmem:[%s219 + $0x38] sm:$0xf] %v248
                  %v250 = vld [vmem:[%s218 + $0x6c] sm:$0xf]
                  %251 = vst [vmem:[%s219 + $0x3c] sm:$0xf] %v250
                  %v252 = vld [vmem:[%s218 + $0x70] sm:$0xf]
                  %253 = vst [vmem:[%s219 + $0x40] sm:$0xf] %v252
                  %v254 = vld [vmem:[%s218 + $0x74] sm:$0xf]
                  %255 = vst [vmem:[%s219 + $0x44] sm:$0xf] %v254
                  %v256 = vld [vmem:[%s218 + $0x90] sm:$0xf]
                  %257 = vst [vmem:[%s219 + $0x48] sm:$0xf] %v256
                  %v258 = vld [vmem:[%s218 + $0x94] sm:$0xf]
                  %259 = vst [vmem:[%s219 + $0x4c] sm:$0xf] %v258
                  %v260 = vld [vmem:[%s218 + $0x98] sm:$0xf]
                  %261 = vst [vmem:[%s219 + $0x50] sm:$0xf] %v260
                  %v262 = vld [vmem:[%s218 + $0x9c] sm:$0xf]
                  %263 = vst [vmem:[%s219 + $0x54] sm:$0xf] %v262
                  %v264 = vld [vmem:[%s218 + $0xa0] sm:$0xf]
                  %265 = vst [vmem:[%s219 + $0x58] sm:$0xf] %v264
                  %v266 = vld [vmem:[%s218 + $0xa4] sm:$0xf]
                  %267 = vst [vmem:[%s219 + $0x5c] sm:$0xf] %v266
                $region63: #{lenet_forward.3} parent=50 // loop_footer
                  %s217 = sadd.s32 1, %s213
                $region64: #{lenet_forward.3} parent=50 // loop_footer_branch
                  %212 = sbr.rel target = $region60
                $region65: #{lenet_forward.3} parent=50 // loop_exit
                  _
              $region51: #{lenet_forward.3} parent=35 // pred_fallthru
                _
            $region36: #{lenet_forward.3} parent=31 // pred_fallthru
              _
            // Predicated region
            $region37: #{lenet_forward.3} parent=31 // pred_check
              _
            $region38: #{lenet_forward.3} parent=31 // pred_check_branch
              %143 = sbr.rel (0) target = $region40
            $region39: #{lenet_forward.3} parent=31 // pred_region
              loop: start=0, step=1, limit=1
              $region41: #{lenet_forward.3} parent=39 // loop_pre_header
                _
              $region42: #{lenet_forward.3} parent=39 // loop_header
                %s146 = sphi 0, %s150
                %p147 = scmp.ge.s32.totalorder %s146, 1
                %s151 = sphi %s137, %s137
                %s152 = sphi %s134, %s134
              $region43: #{lenet_forward.3} parent=39 // loop_header_branch
                %149 = sbr.rel (%p147) target = $region47
              $region44: #{lenet_forward.3} parent=39 // loop_body
                %v153 = vld [vmem:[%s151] sm:$0xf]
                %154 = vst [vmem:[%s152] sm:$0xf] %v153
                %v155 = vld [vmem:[%s151 + $0x4] sm:$0xf]
                %156 = vst [vmem:[%s152 + $0x4] sm:$0xf] %v155
                %v157 = vld [vmem:[%s151 + $0x8] sm:$0xf]
                %158 = vst [vmem:[%s152 + $0x8] sm:$0xf] %v157
                %v159 = vld [vmem:[%s151 + $0xc] sm:$0xf]
                %160 = vst [vmem:[%s152 + $0xc] sm:$0xf] %v159
                %v161 = vld [vmem:[%s151 + $0x10] sm:$0xf]
                %162 = vst [vmem:[%s152 + $0x10] sm:$0xf] %v161
                %v163 = vld [vmem:[%s151 + $0x14] sm:$0xf]
                %164 = vst [vmem:[%s152 + $0x14] sm:$0xf] %v163
                %v165 = vld [vmem:[%s151 + $0x30] sm:$0xf]
                %166 = vst [vmem:[%s152 + $0x18] sm:$0xf] %v165
                %v167 = vld [vmem:[%s151 + $0x34] sm:$0xf]
                %168 = vst [vmem:[%s152 + $0x1c] sm:$0xf] %v167
                %v169 = vld [vmem:[%s151 + $0x38] sm:$0xf]
                %170 = vst [vmem:[%s152 + $0x20] sm:$0xf] %v169
                %v171 = vld [vmem:[%s151 + $0x3c] sm:$0xf]
                %172 = vst [vmem:[%s152 + $0x24] sm:$0xf] %v171
                %v173 = vld [vmem:[%s151 + $0x40] sm:$0xf]
                %174 = vst [vmem:[%s152 + $0x28] sm:$0xf] %v173
                %v175 = vld [vmem:[%s151 + $0x44] sm:$0xf]
                %176 = vst [vmem:[%s152 + $0x2c] sm:$0xf] %v175
                %v177 = vld [vmem:[%s151 + $0x60] sm:$0xf]
                %178 = vst [vmem:[%s152 + $0x30] sm:$0xf] %v177
                %v179 = vld [vmem:[%s151 + $0x64] sm:$0xf]
                %180 = vst [vmem:[%s152 + $0x34] sm:$0xf] %v179
                %v181 = vld [vmem:[%s151 + $0x68] sm:$0xf]
                %182 = vst [vmem:[%s152 + $0x38] sm:$0xf] %v181
                %v183 = vld [vmem:[%s151 + $0x6c] sm:$0xf]
                %184 = vst [vmem:[%s152 + $0x3c] sm:$0xf] %v183
                %v185 = vld [vmem:[%s151 + $0x70] sm:$0xf]
                %186 = vst [vmem:[%s152 + $0x40] sm:$0xf] %v185
                %v187 = vld [vmem:[%s151 + $0x74] sm:$0xf]
                %188 = vst [vmem:[%s152 + $0x44] sm:$0xf] %v187
                %v189 = vld [vmem:[%s151 + $0x90] sm:$0xf]
                %190 = vst [vmem:[%s152 + $0x48] sm:$0xf] %v189
                %v191 = vld [vmem:[%s151 + $0x94] sm:$0xf]
                %192 = vst [vmem:[%s152 + $0x4c] sm:$0xf] %v191
                %v193 = vld [vmem:[%s151 + $0x98] sm:$0xf]
                %194 = vst [vmem:[%s152 + $0x50] sm:$0xf] %v193
                %v195 = vld [vmem:[%s151 + $0x9c] sm:$0xf]
                %196 = vst [vmem:[%s152 + $0x54] sm:$0xf] %v195
                %v197 = vld [vmem:[%s151 + $0xa0] sm:$0xf]
                %198 = vst [vmem:[%s152 + $0x58] sm:$0xf] %v197
                %v199 = vld [vmem:[%s151 + $0xa4] sm:$0xf]
                %200 = vst [vmem:[%s152 + $0x5c] sm:$0xf] %v199
              $region45: #{lenet_forward.3} parent=39 // loop_footer
                %s150 = sadd.s32 1, %s146
              $region46: #{lenet_forward.3} parent=39 // loop_footer_branch
                %145 = sbr.rel target = $region42
              $region47: #{lenet_forward.3} parent=39 // loop_exit
                _
            $region40: #{lenet_forward.3} parent=31 // pred_fallthru
              _
          $region32: #{lenet_forward.3} parent=27 // pred_fallthru
            _
          %268 = vnop
        $region28: #{lenet_forward.3} parent=23 // pred_fallthru
          _
      $region24: #{lenet_forward.3} parent=5 // pred_fallthru
        _
      %p269 = scmp.le.s32.totalorder 1, %s9
      %p270 = scmp.lt.s32.totalorder %s9, 3
      %p271 = pnand %p269, %p270
      %p272 = pneg %p271
      // Predicated region
      $region66: #{lenet_forward.3} parent=5 // pred_check
        _
      $region67: #{lenet_forward.3} parent=5 // pred_check_branch
        %274 = sbr.rel (%p271) target = $region69
      $region68: #{lenet_forward.3} parent=5 // pred_region
        %s275 = ssub.s32 %s9, 1
        %s276 = sand.u32 %s22, 1
        %s277 = sand.u32 %s22, 1
        %s278 = smul.addr %s277, 96
        %s279 = scalar_lea.vmem [#allocation2], %s278
        // Predicated region
        $region70: #{lenet_forward.3} parent=68 // pred_check
          %p280 = pneg %p35
        $region71: #{lenet_forward.3} parent=68 // pred_check_branch
          %282 = sbr.rel (%p280) target = $region73
        $region72: #{lenet_forward.3} parent=68 // pred_region
          _
        $region73: #{lenet_forward.3} parent=68 // pred_fallthru
          _
        %s283 = sand.u32 %s22, 1
        %s284 = sand.u32 %s22, 1
        %s285 = smul.addr %s284, 96
        %s286 = scalar_lea.vmem [#allocation2], %s285
        %p287 = pneg %p35
        %p288 = pneg %p32
        %p289 = pneg %p56
        %p290 = pneg %p53
        %p291 = pneg %p77
        %p292 = pneg %p74
        %p293 = pneg %p103
        %p294 = pneg %p100
        %s295 = smul.u32 6, %s14
        %p296 = scmp.lt.s32.totalorder %s295, 11
        %s297 = scalar_select %p296, %s295, 11
        %s298 = smul.addr %s297, 4
        %s299 = scalar_lea.vmem %s3, %s298
        %s300 = smul.u32 6, %s14
        %s301 = smul.u32 6, %s14
        %p302 = scmp.lt.s32.totalorder %s301, 11
        %s303 = scalar_select %p302, %s301, 11
        %s304 = smul.addr %s303, 4
        %s305 = scalar_lea.vmem %s3, %s304
        %s306 = smul.u32 6, %s14
        %v308 = vld [vmem:[%s279] sm:$0xf]
        %v309 = vld [vmem:[%s279 + $0x4] sm:$0xf]
        %v310 = vld [vmem:[%s279 + $0x8] sm:$0xf]
        %v311 = vld [vmem:[%s279 + $0xc] sm:$0xf]
        %v312 = vld [vmem:[%s279 + $0x10] sm:$0xf]
        %v313 = vld [vmem:[%s279 + $0x14] sm:$0xf]
        %v314 = vld [vmem:[%s279 + $0x18] sm:$0xf]
        %v315 = vld [vmem:[%s279 + $0x1c] sm:$0xf]
        %v316 = vld [vmem:[%s279 + $0x20] sm:$0xf]
        %v317 = vld [vmem:[%s279 + $0x24] sm:$0xf]
        %v318 = vld [vmem:[%s279 + $0x28] sm:$0xf]
        %v319 = vld [vmem:[%s279 + $0x2c] sm:$0xf]
        %v320 = vld [vmem:[%s279 + $0x30] sm:$0xf]
        %v321 = vld [vmem:[%s279 + $0x34] sm:$0xf]
        %v322 = vld [vmem:[%s279 + $0x38] sm:$0xf]
        %v323 = vld [vmem:[%s279 + $0x3c] sm:$0xf]
        %v324 = vld [vmem:[%s279 + $0x40] sm:$0xf]
        %v325 = vld [vmem:[%s279 + $0x44] sm:$0xf]
        %v326 = vld [vmem:[%s279 + $0x48] sm:$0xf]
        %v327 = vld [vmem:[%s279 + $0x4c] sm:$0xf]
        %v328 = vld [vmem:[%s279 + $0x50] sm:$0xf]
        %v329 = vld [vmem:[%s279 + $0x54] sm:$0xf]
        %v330 = vld [vmem:[%s279 + $0x58] sm:$0xf]
        %v331 = vld [vmem:[%s279 + $0x5c] sm:$0xf]
        %v332 = vld [vmem:[%s1] sm:$0xf]
        %v333 = vld [vmem:[%s1 + $0x4] sm:$0xf]
        %v334 = vld [vmem:[%s1 + $0x8] sm:$0xf]
        %v335 = vld [vmem:[%s1 + $0xc] sm:$0xf]
        %v336 = vld [vmem:[%s1 + $0x10] sm:$0xf]
        %v337 = vld [vmem:[%s1 + $0x14] sm:$0xf]
        %v338 = vld [vmem:[%s1 + $0x18] sm:$0xf]
        %v339 = vld [vmem:[%s1 + $0x1c] sm:$0xf]
        %v340 = vld [vmem:[%s1 + $0x20] sm:$0xf]
        %v341 = vld [vmem:[%s1 + $0x24] sm:$0xf]
        %v342 = vld [vmem:[%s1 + $0x28] sm:$0xf]
        %v343 = vld [vmem:[%s1 + $0x2c] sm:$0xf]
        %v344 = vld [vmem:[%s1 + $0x30] sm:$0xf]
        %v345 = vld [vmem:[%s1 + $0x34] sm:$0xf]
        %v346 = vld [vmem:[%s1 + $0x38] sm:$0xf]
        %v347 = vld [vmem:[%s1 + $0x3c] sm:$0xf]
        %v372 = vunpack.c.l.b16 %v308
        %v373 = vunpack.c.l.b16 %v309
        %v374 = vunpack.c.l.b16 %v310
        %v375 = vunpack.c.l.b16 %v311
        %v376 = vunpack.c.l.b16 %v312
        %v377 = vunpack.c.l.b16 %v313
        %v378 = vunpack.c.l.b16 %v314
        %v379 = vunpack.c.l.b16 %v315
        %v380 = vunpack.c.l.b16 %v316
        %v381 = vunpack.c.l.b16 %v317
        %v382 = vunpack.c.l.b16 %v318
        %v383 = vunpack.c.l.b16 %v319
        %v384 = vunpack.c.l.b16 %v320
        %v385 = vunpack.c.l.b16 %v321
        %v386 = vunpack.c.l.b16 %v322
        %v387 = vunpack.c.l.b16 %v323
        %v388 = vunpack.c.l.b16 %v324
        %v389 = vunpack.c.l.b16 %v325
        %v390 = vunpack.c.l.b16 %v326
        %v391 = vunpack.c.l.b16 %v327
        %v392 = vunpack.c.l.b16 %v328
        %v393 = vunpack.c.l.b16 %v329
        %v394 = vunpack.c.l.b16 %v330
        %v395 = vunpack.c.l.b16 %v331
        %v396 = vpack.c.b16 %v373, %v372
        %v397 = vpack.c.b16 %v375, %v374
        %v398 = vpack.c.b16 %v377, %v376
        %v399 = vpack.c.b16 %v379, %v378
        %v400 = vpack.c.b16 %v381, %v380
        %v401 = vpack.c.b16 %v383, %v382
        %v402 = vpack.c.b16 %v385, %v384
        %v403 = vpack.c.b16 %v387, %v386
        %v404 = vpack.c.b16 %v389, %v388
        %v405 = vpack.c.b16 %v391, %v390
        %v406 = vpack.c.b16 %v393, %v392
        %v407 = vpack.c.b16 %v395, %v394
        %v436 = vunpack.c.l.b16 %v332
        %v437 = vunpack.c.l.b16 %v333
        %v438 = vunpack.c.l.b16 %v334
        %v439 = vunpack.c.l.b16 %v335
        %v440 = vunpack.c.l.b16 %v336
        %v441 = vunpack.c.l.b16 %v337
        %v442 = vunpack.c.l.b16 %v338
        %v443 = vunpack.c.l.b16 %v339
        %v444 = vunpack.c.l.b16 %v340
        %v445 = vunpack.c.l.b16 %v341
        %v446 = vunpack.c.l.b16 %v342
        %v447 = vunpack.c.l.b16 %v343
        %v448 = vunpack.c.l.b16 %v344
        %v449 = vunpack.c.l.b16 %v345
        %v450 = vunpack.c.l.b16 %v346
        %v451 = vunpack.c.l.b16 %v347
        %v452 = vpack.c.b16 %v437, %v436
        %v453 = vpack.c.b16 %v439, %v438
        %v454 = vpack.c.b16 %v441, %v440
        %v455 = vpack.c.b16 %v443, %v442
        %v456 = vpack.c.b16 %v445, %v444
        %v457 = vpack.c.b16 %v447, %v446
        %v458 = vpack.c.b16 %v449, %v448
        %v459 = vpack.c.b16 %v451, %v450
        %468 = vmatprep.subr.bf16.mxu0 0
        %469 = vmatpush1.bf16.msra.mxu0 %v452
        %470 = vmatprep.subr.bf16.mxu0 0
        %471 = vmatpush1.bf16.msra.mxu0 %v453
        %472 = vmatprep.subr.bf16.mxu0 0
        %473 = vmatpush1.bf16.msra.mxu0 %v454
        %474 = vmatprep.subr.bf16.mxu0 0
        %475 = vmatpush1.bf16.msra.mxu0 %v455
        %476 = vmatprep.subr.bf16.mxu0 0
        %477 = vmatpush1.bf16.msra.mxu0 %v456
        %478 = vmatprep.subr.bf16.mxu0 0
        %479 = vmatpush1.bf16.msra.mxu0 %v457
        %480 = vmatprep.subr.bf16.mxu0 0
        %481 = vmatpush1.bf16.msra.mxu0 %v458
        %482 = vmatprep.subr.bf16.mxu0 0
        %483 = vmatpush1.bf16.msra.mxu0 %v459
        %484 = vmatprep.subr.bf16.mxu0 0
        %485 = vmatpush1.bf16.msra.mxu0 0
        %486 = vmatprep.subr.bf16.mxu0 0
        %487 = vmatpush1.bf16.msra.mxu0 0
        %488 = vmatprep.subr.bf16.mxu0 0
        %489 = vmatpush1.bf16.msra.mxu0 0
        %490 = vmatprep.subr.bf16.mxu0 0
        %491 = vmatpush1.bf16.msra.mxu0 0
        %492 = vmatprep.subr.bf16.mxu0 0
        %493 = vmatpush1.bf16.msra.mxu0 0
        %494 = vmatprep.subr.bf16.mxu0 0
        %495 = vmatpush1.bf16.msra.mxu0 0
        %496 = vmatprep.subr.bf16.mxu0 0
        %497 = vmatpush1.bf16.msra.mxu0 0
        %498 = vmatprep.subr.bf16.mxu0 0
        %499 = vmatpush1.bf16.msra.mxu0 0
        %500 = vmatprep.mubr.bf16.mxu0 0
        %501 = vmatmul.mubr.bf16.gmra.mrb[0].mxu0 %v396
        %v502 = vpop.f32.mrb[0].mxu0
        %v503 = vadd.f32 0.0, %v502
        %v504 = vpop.f32.mrb[0].mxu0
        %v505 = vpop.f32.mrb[0].mxu0
        %v506 = vadd.f32 0.0, %v505
        %v507 = vpop.f32.mrb[0].mxu0
        %508 = vmatprep.mubr.bf16.mxu0 0
        %509 = vmatmul.mubr.bf16.gmra.mrb[0].mxu0 %v397
        %v510 = vpop.f32.mrb[0].mxu0
        %v511 = vadd.f32 0.0, %v510
        %v512 = vpop.f32.mrb[0].mxu0
        %v513 = vpop.f32.mrb[0].mxu0
        %v514 = vadd.f32 0.0, %v513
        %v515 = vpop.f32.mrb[0].mxu0
        %516 = vmatprep.mubr.bf16.mxu0 0
        %517 = vmatmul.mubr.bf16.gmra.mrb[0].mxu0 %v398
        %v518 = vpop.f32.mrb[0].mxu0
        %v519 = vadd.f32 0.0, %v518
        %v520 = vpop.f32.mrb[0].mxu0
        %v521 = vpop.f32.mrb[0].mxu0
        %v522 = vadd.f32 0.0, %v521
        %v523 = vpop.f32.mrb[0].mxu0
        %524 = vmatprep.mubr.bf16.mxu0 0
        %525 = vmatmul.mubr.bf16.gmra.mrb[0].mxu0 %v399
        %v526 = vpop.f32.mrb[0].mxu0
        %v527 = vadd.f32 0.0, %v526
        %v528 = vpop.f32.mrb[0].mxu0
        %v529 = vpop.f32.mrb[0].mxu0
        %v530 = vadd.f32 0.0, %v529
        %v531 = vpop.f32.mrb[0].mxu0
        %532 = vmatprep.mubr.bf16.mxu0 0
        %533 = vmatmul.mubr.bf16.gmra.mrb[0].mxu0 %v400
        %v534 = vpop.f32.mrb[0].mxu0
        %v535 = vadd.f32 0.0, %v534
        %v536 = vpop.f32.mrb[0].mxu0
        %v537 = vpop.f32.mrb[0].mxu0
        %v538 = vadd.f32 0.0, %v537
        %v539 = vpop.f32.mrb[0].mxu0
        %540 = vmatprep.mubr.bf16.mxu0 0
        %541 = vmatmul.mubr.bf16.gmra.mrb[0].mxu0 %v401
        %v542 = vpop.f32.mrb[0].mxu0
        %v543 = vadd.f32 0.0, %v542
        %v544 = vpop.f32.mrb[0].mxu0
        %v545 = vpop.f32.mrb[0].mxu0
        %v546 = vadd.f32 0.0, %v545
        %v547 = vpop.f32.mrb[0].mxu0
        %548 = vmatprep.mubr.bf16.mxu0 0
        %549 = vmatmul.mubr.bf16.gmra.mrb[0].mxu0 %v402
        %v550 = vpop.f32.mrb[0].mxu0
        %v551 = vadd.f32 0.0, %v550
        %v552 = vpop.f32.mrb[0].mxu0
        %v553 = vpop.f32.mrb[0].mxu0
        %v554 = vadd.f32 0.0, %v553
        %v555 = vpop.f32.mrb[0].mxu0
        %556 = vmatprep.mubr.bf16.mxu0 0
        %557 = vmatmul.mubr.bf16.gmra.mrb[0].mxu0 %v403
        %v558 = vpop.f32.mrb[0].mxu0
        %v559 = vadd.f32 0.0, %v558
        %v560 = vpop.f32.mrb[0].mxu0
        %v561 = vpop.f32.mrb[0].mxu0
        %v562 = vadd.f32 0.0, %v561
        %v563 = vpop.f32.mrb[0].mxu0
        %564 = vmatprep.mubr.bf16.mxu0 0
        %565 = vmatmul.mubr.bf16.gmra.mrb[0].mxu0 %v404
        %v566 = vpop.f32.mrb[0].mxu0
        %v567 = vadd.f32 0.0, %v566
        %v568 = vpop.f32.mrb[0].mxu0
        %v569 = vpop.f32.mrb[0].mxu0
        %v570 = vadd.f32 0.0, %v569
        %v571 = vpop.f32.mrb[0].mxu0
        %572 = vmatprep.mubr.bf16.mxu0 0
        %573 = vmatmul.mubr.bf16.gmra.mrb[0].mxu0 %v405
        %v574 = vpop.f32.mrb[0].mxu0
        %v575 = vadd.f32 0.0, %v574
        %v576 = vpop.f32.mrb[0].mxu0
        %v577 = vpop.f32.mrb[0].mxu0
        %v578 = vadd.f32 0.0, %v577
        %v579 = vpop.f32.mrb[0].mxu0
        %580 = vmatprep.mubr.bf16.mxu0 0
        %581 = vmatmul.mubr.bf16.gmra.mrb[0].mxu0 %v406
        %v582 = vpop.f32.mrb[0].mxu0
        %v583 = vadd.f32 0.0, %v582
        %v584 = vpop.f32.mrb[0].mxu0
        %v585 = vpop.f32.mrb[0].mxu0
        %v586 = vadd.f32 0.0, %v585
        %v587 = vpop.f32.mrb[0].mxu0
        %588 = vmatprep.mubr.bf16.mxu0 0
        %589 = vmatmul.mubr.bf16.gmra.mrb[0].mxu0 %v407
        %v590 = vpop.f32.mrb[0].mxu0
        %v591 = vadd.f32 0.0, %v590
        %v592 = vpop.f32.mrb[0].mxu0
        %v593 = vpop.f32.mrb[0].mxu0
        %v594 = vadd.f32 0.0, %v593
        %v595 = vpop.f32.mrb[0].mxu0
        %596 = vdwg.mxu0
        %v597 = vmax.f32 %v503, %v527
        %v598 = vmax.f32 %v506, %v530
        %v599 = vmax.f32 %v511, %v535
        %v600 = vmax.f32 %v514, %v538
        %v601 = vmax.f32 %v519, %v543
        %v602 = vmax.f32 %v522, %v546
        %v603 = vmax.f32 %v597, %v551
        %v604 = vmax.f32 %v598, %v554
        %v605 = vmax.f32 %v599, %v559
        %v606 = vmax.f32 %v600, %v562
        %v607 = vmax.f32 %v601, %v567
        %v608 = vmax.f32 %v602, %v570
        %v609 = vmax.f32 %v603, %v575
        %v610 = vmax.f32 %v604, %v578
        %v611 = vmax.f32 %v605, %v583
        %v612 = vmax.f32 %v606, %v586
        %v613 = vmax.f32 %v607, %v591
        %v614 = vmax.f32 %v608, %v594
        %v615 = vld [vmem:[%s2] sm:$0x1]
        %v617 = vlaneseq
        %v618 = vshrl.u32 %v617, 7
        %v619 = vsub.s32 0, %v618
        %v620 = vrot.slane %v615, %v619
        %v622 = vadd.f32 %v609, %v620
        %v623 = vadd.f32 %v610, %v620
        %v624 = vadd.f32 %v611, %v620
        %v625 = vadd.f32 %v612, %v620
        %v626 = vadd.f32 %v613, %v620
        %v627 = vadd.f32 %v614, %v620
        %v628 = vmax.f32 %v622, 0.0
        %v629 = vmax.f32 %v623, 0.0
        %v630 = vmax.f32 %v624, 0.0
        %v631 = vmax.f32 %v625, 0.0
        %v632 = vmax.f32 %v626, 0.0
        %v633 = vmax.f32 %v627, 0.0
        %v634 = vpack.c.bf16 %v629, %v628
        %v635 = vpack.c.bf16 %v631, %v630
        %v636 = vpack.c.bf16 %v633, %v632
        %v640 = vunpack.c.l.b16 %v634
        %v641 = vunpack.c.h.b16 %v634
        %v642 = vunpack.c.l.b16 %v635
        %v643 = vunpack.c.h.b16 %v635
        %v644 = vunpack.c.l.b16 %v636
        %v645 = vunpack.c.h.b16 %v636
        %v646 = vpack.c.b16 %v640, %v640
        %v647 = vpack.c.b16 %v641, %v641
        %v648 = vpack.c.b16 %v642, %v642
        %v649 = vpack.c.b16 %v643, %v643
        %v650 = vpack.c.b16 %v644, %v644
        %v651 = vpack.c.b16 %v645, %v645
        %658 = vst [vmem:[%s305] sm:$0xf] %v646
        %659 = vst [vmem:[%s305 + $0x4] sm:$0xf] %v647
        %660 = vst [vmem:[%s305 + $0x8] sm:$0xf] %v648
        %661 = vst [vmem:[%s305 + $0xc] sm:$0xf] %v649
        %662 = vst [vmem:[%s305 + $0x10] sm:$0xf] %v650
        %663 = vst [vmem:[%s305 + $0x14] sm:$0xf] %v651
        %s664 = smul.u32 6, %s14
        %p665 = scmp.lt.s32.totalorder %s664, 11
        %s666 = scalar_select %p665, %s664, 11
        %s667 = smul.addr %s666, 4
        %s668 = scalar_lea.vmem %s3, %s667
        // Predicated region
        $region74: #{lenet_forward.3} parent=68 // pred_check
          %p669 = pneg %p100
        $region75: #{lenet_forward.3} parent=68 // pred_check_branch
          %671 = sbr.rel (%p669) target = $region77
        $region76: #{lenet_forward.3} parent=68 // pred_region
          %s672 = smul.u32 6, %s14
        $region77: #{lenet_forward.3} parent=68 // pred_fallthru
          _
      $region69: #{lenet_forward.3} parent=5 // pred_fallthru
        _
      %p673 = scmp.le.s32.totalorder 2, %s9
      // Predicated region
      $region78: #{lenet_forward.3} parent=5 // pred_check
        %p674 = pneg %p673
      $region79: #{lenet_forward.3} parent=5 // pred_check_branch
        %676 = sbr.rel (%p674) target = $region81
      $region80: #{lenet_forward.3} parent=5 // pred_region
        %s677 = ssub.s32 %s9, 2
        // Predicated region
        $region82: #{lenet_forward.3} parent=80 // pred_check
          %p678 = pneg %p106
        $region83: #{lenet_forward.3} parent=80 // pred_check_branch
          %680 = sbr.rel (%p678) target = $region85
        $region84: #{lenet_forward.3} parent=80 // pred_region
          %s681 = smul.u32 6, %s15
          %p682 = scmp.lt.s32.totalorder %s681, 11
          %s683 = scalar_select %p682, %s681, 11
          %s684 = smul.addr %s683, 4
          %s685 = scalar_lea.vmem %s3, %s684
        $region85: #{lenet_forward.3} parent=80 // pred_fallthru
          _
      $region81: #{lenet_forward.3} parent=5 // pred_fallthru
        _
    $region6: #{lenet_forward.3} parent=1 // loop_footer
      %s13 = sadd.s32 1, %s9
    $region7: #{lenet_forward.3} parent=1 // loop_footer_branch
      %8 = sbr.rel target = $region3
    $region8: #{lenet_forward.3} parent=1 // loop_exit
      _

// kernel: lenet_forward.4
$region0: #{lenet_forward.4}
  #allocation0 [shape = 'u32[]', space=smem, size = 0x4, offset = 0x4, fixed_abs, tag = 'smem constant byte address 0x4 - core index']
  #allocation1 [shape = 'u32[144,128]{1,0:T(1,128)}', space=vmem, size = 0x12000, scoped, tag = 'internal scratch']
  %s0 = inlined_call_operand.vmem [shape: bf16[4,16,512], index: 0, kind: input, shape index: {}]
  %s1 = inlined_call_operand.vmem [shape: bf16[512,128], index: 1, kind: input, shape index: {}]
  %s2 = inlined_call_operand.vmem [shape: f32[1,128], index: 2, kind: input, shape index: {}]
  %s3 = inlined_call_operand.vmem [shape: bf16[16,128], index: 3, kind: output, shape index: {}]
  %s4 = sld [smem:[#allocation0]]
  $region22: #{lenet_forward.4} parent=0
    _
  %s6 = ssub.s32 1, %s4
  %s7 = scalar_select 0, %s6, %s4
  // Predicated region
  $region2: #{lenet_forward.4} parent=0 // pred_check
    _
  $region3: #{lenet_forward.4} parent=0 // pred_check_branch
    %9 = sbr.rel (0) target = $region5
  $region4: #{lenet_forward.4} parent=0 // pred_region
    _
  $region5: #{lenet_forward.4} parent=0 // pred_fallthru
    _
  // Predicated region
  $region6: #{lenet_forward.4} parent=0 // pred_check
    _
  $region7: #{lenet_forward.4} parent=0 // pred_check_branch
    %11 = sbr.rel (0) target = $region9
  $region8: #{lenet_forward.4} parent=0 // pred_region
    _
  $region9: #{lenet_forward.4} parent=0 // pred_fallthru
    _
  // Predicated region
  $region10: #{lenet_forward.4} parent=0 // pred_check
    _
  $region11: #{lenet_forward.4} parent=0 // pred_check_branch
    %13 = sbr.rel (0) target = $region13
  $region12: #{lenet_forward.4} parent=0 // pred_region
    _
  $region13: #{lenet_forward.4} parent=0 // pred_fallthru
    _
  %v15 = vld [vmem:[%s0] sm:$0xff]
  %v16 = vld [vmem:[%s0 + $0x8] sm:$0xff]
  %v17 = vld [vmem:[%s0 + $0x10] sm:$0xff]
  %v18 = vld [vmem:[%s0 + $0x18] sm:$0xff]
  %v19 = vld [vmem:[%s0 + $0x20] sm:$0xff]
  %v20 = vld [vmem:[%s0 + $0x28] sm:$0xff]
  %v21 = vld [vmem:[%s0 + $0x30] sm:$0xff]
  %v22 = vld [vmem:[%s0 + $0x38] sm:$0xff]
  %v23 = vld [vmem:[%s0 + $0x40] sm:$0xff]
  %v24 = vld [vmem:[%s0 + $0x48] sm:$0xff]
  %v25 = vld [vmem:[%s0 + $0x50] sm:$0xff]
  %v26 = vld [vmem:[%s0 + $0x58] sm:$0xff]
  %v27 = vld [vmem:[%s0 + $0x60] sm:$0xff]
  %v28 = vld [vmem:[%s0 + $0x68] sm:$0xff]
  %v29 = vld [vmem:[%s0 + $0x70] sm:$0xff]
  %v30 = vld [vmem:[%s0 + $0x78] sm:$0xff]
  %v31 = vld [vmem:[%s1] sm:$0xf]
  %v32 = vld [vmem:[%s1 + $0x4] sm:$0xf]
  %v33 = vld [vmem:[%s1 + $0x8] sm:$0xf]
  %v34 = vld [vmem:[%s1 + $0xc] sm:$0xf]
  %v35 = vld [vmem:[%s1 + $0x10] sm:$0xf]
  %v36 = vld [vmem:[%s1 + $0x14] sm:$0xf]
  %v37 = vld [vmem:[%s1 + $0x18] sm:$0xf]
  %v38 = vld [vmem:[%s1 + $0x1c] sm:$0xf]
  %v39 = vld [vmem:[%s1 + $0x20] sm:$0xf]
  %v40 = vld [vmem:[%s1 + $0x24] sm:$0xf]
  %v41 = vld [vmem:[%s1 + $0x28] sm:$0xf]
  %v42 = vld [vmem:[%s1 + $0x2c] sm:$0xf]
  %v43 = vld [vmem:[%s1 + $0x30] sm:$0xf]
  %v44 = vld [vmem:[%s1 + $0x34] sm:$0xf]
  %v45 = vld [vmem:[%s1 + $0x38] sm:$0xf]
  %v46 = vld [vmem:[%s1 + $0x3c] sm:$0xf]
  %v47 = vld [vmem:[%s1 + $0x40] sm:$0xf]
  %v48 = vld [vmem:[%s1 + $0x44] sm:$0xf]
  %v49 = vld [vmem:[%s1 + $0x48] sm:$0xf]
  %v50 = vld [vmem:[%s1 + $0x4c] sm:$0xf]
  %v51 = vld [vmem:[%s1 + $0x50] sm:$0xf]
  %v52 = vld [vmem:[%s1 + $0x54] sm:$0xf]
  %v53 = vld [vmem:[%s1 + $0x58] sm:$0xf]
  %v54 = vld [vmem:[%s1 + $0x5c] sm:$0xf]
  %v55 = vld [vmem:[%s1 + $0x60] sm:$0xf]
  %v56 = vld [vmem:[%s1 + $0x64] sm:$0xf]
  %v57 = vld [vmem:[%s1 + $0x68] sm:$0xf]
  %v58 = vld [vmem:[%s1 + $0x6c] sm:$0xf]
  %v59 = vld [vmem:[%s1 + $0x70] sm:$0xf]
  %v60 = vld [vmem:[%s1 + $0x74] sm:$0xf]
  %v61 = vld [vmem:[%s1 + $0x78] sm:$0xf]
  %v62 = vld [vmem:[%s1 + $0x7c] sm:$0xf]
  %v63 = vld [vmem:[%s1 + $0x80] sm:$0xf]
  %v64 = vld [vmem:[%s1 + $0x84] sm:$0xf]
  %v65 = vld [vmem:[%s1 + $0x88] sm:$0xf]
  %v66 = vld [vmem:[%s1 + $0x8c] sm:$0xf]
  %v67 = vld [vmem:[%s1 + $0x90] sm:$0xf]
  %v68 = vld [vmem:[%s1 + $0x94] sm:$0xf]
  %v69 = vld [vmem:[%s1 + $0x98] sm:$0xf]
  %v70 = vld [vmem:[%s1 + $0x9c] sm:$0xf]
  %v71 = vld [vmem:[%s1 + $0xa0] sm:$0xf]
  %v72 = vld [vmem:[%s1 + $0xa4] sm:$0xf]
  %v73 = vld [vmem:[%s1 + $0xa8] sm:$0xf]
  %v74 = vld [vmem:[%s1 + $0xac] sm:$0xf]
  %v75 = vld [vmem:[%s1 + $0xb0] sm:$0xf]
  %v76 = vld [vmem:[%s1 + $0xb4] sm:$0xf]
  %v77 = vld [vmem:[%s1 + $0xb8] sm:$0xf]
  %v78 = vld [vmem:[%s1 + $0xbc] sm:$0xf]
  %v79 = vld [vmem:[%s1 + $0xc0] sm:$0xf]
  %v80 = vld [vmem:[%s1 + $0xc4] sm:$0xf]
  %v81 = vld [vmem:[%s1 + $0xc8] sm:$0xf]
  %v82 = vld [vmem:[%s1 + $0xcc] sm:$0xf]
  %v83 = vld [vmem:[%s1 + $0xd0] sm:$0xf]
  %v84 = vld [vmem:[%s1 + $0xd4] sm:$0xf]
  %v85 = vld [vmem:[%s1 + $0xd8] sm:$0xf]
  %v86 = vld [vmem:[%s1 + $0xdc] sm:$0xf]
  %v87 = vld [vmem:[%s1 + $0xe0] sm:$0xf]
  %v88 = vld [vmem:[%s1 + $0xe4] sm:$0xf]
  %v89 = vld [vmem:[%s1 + $0xe8] sm:$0xf]
  %v90 = vld [vmem:[%s1 + $0xec] sm:$0xf]
  %v91 = vld [vmem:[%s1 + $0xf0] sm:$0xf]
  %v92 = vld [vmem:[%s1 + $0xf4] sm:$0xf]
  %v93 = vld [vmem:[%s1 + $0xf8] sm:$0xf]
  %v94 = vld [vmem:[%s1 + $0xfc] sm:$0xf]
  %v111 = vunpack.c.l.b16 %v15
  %v112 = vunpack.c.h.b16 %v15
  %v113 = vunpack.c.l.b16 %v16
  %v114 = vunpack.c.h.b16 %v16
  %v115 = vunpack.c.l.b16 %v17
  %v116 = vunpack.c.h.b16 %v17
  %v117 = vunpack.c.l.b16 %v18
  %v118 = vunpack.c.h.b16 %v18
  %v119 = vunpack.c.l.b16 %v19
  %v120 = vunpack.c.h.b16 %v19
  %v121 = vunpack.c.l.b16 %v20
  %v122 = vunpack.c.h.b16 %v20
  %v123 = vunpack.c.l.b16 %v21
  %v124 = vunpack.c.h.b16 %v21
  %v125 = vunpack.c.l.b16 %v22
  %v126 = vunpack.c.h.b16 %v22
  %v127 = vunpack.c.l.b16 %v23
  %v128 = vunpack.c.h.b16 %v23
  %v129 = vunpack.c.l.b16 %v24
  %v130 = vunpack.c.h.b16 %v24
  %v131 = vunpack.c.l.b16 %v25
  %v132 = vunpack.c.h.b16 %v25
  %v133 = vunpack.c.l.b16 %v26
  %v134 = vunpack.c.h.b16 %v26
  %v135 = vunpack.c.l.b16 %v27
  %v136 = vunpack.c.h.b16 %v27
  %v137 = vunpack.c.l.b16 %v28
  %v138 = vunpack.c.h.b16 %v28
  %v139 = vunpack.c.l.b16 %v29
  %v140 = vunpack.c.h.b16 %v29
  %v141 = vunpack.c.l.b16 %v30
  %v142 = vunpack.c.h.b16 %v30
  %v143 = vpack.c.b16 %v115, %v111
  %v144 = vpack.c.b16 %v116, %v112
  %v145 = vpack.c.b16 %v117, %v113
  %v146 = vpack.c.b16 %v118, %v114
  %v147 = vpack.c.b16 %v123, %v119
  %v148 = vpack.c.b16 %v124, %v120
  %v149 = vpack.c.b16 %v125, %v121
  %v150 = vpack.c.b16 %v126, %v122
  %v151 = vpack.c.b16 %v131, %v127
  %v152 = vpack.c.b16 %v132, %v128
  %v153 = vpack.c.b16 %v133, %v129
  %v154 = vpack.c.b16 %v134, %v130
  %v155 = vpack.c.b16 %v139, %v135
  %v156 = vpack.c.b16 %v140, %v136
  %v157 = vpack.c.b16 %v141, %v137
  %v158 = vpack.c.b16 %v142, %v138
  %v239 = vunpack.c.l.b16 %v31
  %v240 = vunpack.c.l.b16 %v32
  %v241 = vunpack.c.l.b16 %v33
  %v242 = vunpack.c.l.b16 %v34
  %v243 = vunpack.c.l.b16 %v35
  %v244 = vunpack.c.l.b16 %v36
  %v245 = vunpack.c.l.b16 %v37
  %v246 = vunpack.c.l.b16 %v38
  %v247 = vunpack.c.l.b16 %v39
  %v248 = vunpack.c.l.b16 %v40
  %v249 = vunpack.c.l.b16 %v41
  %v250 = vunpack.c.l.b16 %v42
  %v251 = vunpack.c.l.b16 %v43
  %v252 = vunpack.c.l.b16 %v44
  %v253 = vunpack.c.l.b16 %v45
  %v254 = vunpack.c.l.b16 %v46
  %v255 = vunpack.c.l.b16 %v47
  %v256 = vunpack.c.l.b16 %v48
  %v257 = vunpack.c.l.b16 %v49
  %v258 = vunpack.c.l.b16 %v50
  %v259 = vunpack.c.l.b16 %v51
  %v260 = vunpack.c.l.b16 %v52
  %v261 = vunpack.c.l.b16 %v53
  %v262 = vunpack.c.l.b16 %v54
  %v263 = vunpack.c.l.b16 %v55
  %v264 = vunpack.c.l.b16 %v56
  %v265 = vunpack.c.l.b16 %v57
  %v266 = vunpack.c.l.b16 %v58
  %v267 = vunpack.c.l.b16 %v59
  %v268 = vunpack.c.l.b16 %v60
  %v269 = vunpack.c.l.b16 %v61
  %v270 = vunpack.c.l.b16 %v62
  %v271 = vunpack.c.l.b16 %v63
  %v272 = vunpack.c.l.b16 %v64
  %v273 = vunpack.c.l.b16 %v65
  %v274 = vunpack.c.l.b16 %v66
  %v275 = vunpack.c.l.b16 %v67
  %v276 = vunpack.c.l.b16 %v68
  %v277 = vunpack.c.l.b16 %v69
  %v278 = vunpack.c.l.b16 %v70
  %v279 = vunpack.c.l.b16 %v71
  %v280 = vunpack.c.l.b16 %v72
  %v281 = vunpack.c.l.b16 %v73
  %v282 = vunpack.c.l.b16 %v74
  %v283 = vunpack.c.l.b16 %v75
  %v284 = vunpack.c.l.b16 %v76
  %v285 = vunpack.c.l.b16 %v77
  %v286 = vunpack.c.l.b16 %v78
  %v287 = vunpack.c.l.b16 %v79
  %v288 = vunpack.c.l.b16 %v80
  %v289 = vunpack.c.l.b16 %v81
  %v290 = vunpack.c.l.b16 %v82
  %v291 = vunpack.c.l.b16 %v83
  %v292 = vunpack.c.l.b16 %v84
  %v293 = vunpack.c.l.b16 %v85
  %v294 = vunpack.c.l.b16 %v86
  %v295 = vunpack.c.l.b16 %v87
  %v296 = vunpack.c.l.b16 %v88
  %v297 = vunpack.c.l.b16 %v89
  %v298 = vunpack.c.l.b16 %v90
  %v299 = vunpack.c.l.b16 %v91
  %v300 = vunpack.c.l.b16 %v92
  %v301 = vunpack.c.l.b16 %v93
  %v302 = vunpack.c.l.b16 %v94
  %v303 = vpack.c.b16 %v240, %v239
  %v304 = vpack.c.b16 %v242, %v241
  %v305 = vpack.c.b16 %v244, %v243
  %v306 = vpack.c.b16 %v246, %v245
  %v307 = vpack.c.b16 %v248, %v247
  %v308 = vpack.c.b16 %v250, %v249
  %v309 = vpack.c.b16 %v252, %v251
  %v310 = vpack.c.b16 %v254, %v253
  %v311 = vpack.c.b16 %v256, %v255
  %v312 = vpack.c.b16 %v258, %v257
  %v313 = vpack.c.b16 %v260, %v259
  %v314 = vpack.c.b16 %v262, %v261
  %v315 = vpack.c.b16 %v264, %v263
  %v316 = vpack.c.b16 %v266, %v265
  %v317 = vpack.c.b16 %v268, %v267
  %v318 = vpack.c.b16 %v270, %v269
  %v319 = vpack.c.b16 %v272, %v271
  %v320 = vpack.c.b16 %v274, %v273
  %v321 = vpack.c.b16 %v276, %v275
  %v322 = vpack.c.b16 %v278, %v277
  %v323 = vpack.c.b16 %v280, %v279
  %v324 = vpack.c.b16 %v282, %v281
  %v325 = vpack.c.b16 %v284, %v283
  %v326 = vpack.c.b16 %v286, %v285
  %v327 = vpack.c.b16 %v288, %v287
  %v328 = vpack.c.b16 %v290, %v289
  %v329 = vpack.c.b16 %v292, %v291
  %v330 = vpack.c.b16 %v294, %v293
  %v331 = vpack.c.b16 %v296, %v295
  %v332 = vpack.c.b16 %v298, %v297
  %v333 = vpack.c.b16 %v300, %v299
  %v334 = vpack.c.b16 %v302, %v301
  %367 = vmatprep.subr.bf16.mxu0 0
  %368 = vmatpush1.bf16.msra.mxu0 %v303
  %369 = vmatprep.subr.bf16.mxu0 0
  %370 = vmatpush1.bf16.msra.mxu0 %v304
  %371 = vmatprep.subr.bf16.mxu0 0
  %372 = vmatpush1.bf16.msra.mxu0 %v305
  %373 = vmatprep.subr.bf16.mxu0 0
  %374 = vmatpush1.bf16.msra.mxu0 %v306
  %375 = vmatprep.subr.bf16.mxu0 0
  %376 = vmatpush1.bf16.msra.mxu0 %v307
  %377 = vmatprep.subr.bf16.mxu0 0
  %378 = vmatpush1.bf16.msra.mxu0 %v308
  %379 = vmatprep.subr.bf16.mxu0 0
  %380 = vmatpush1.bf16.msra.mxu0 %v309
  %381 = vmatprep.subr.bf16.mxu0 0
  %382 = vmatpush1.bf16.msra.mxu0 %v310
  %383 = vmatprep.subr.bf16.mxu0 0
  %384 = vmatpush1.bf16.msra.mxu0 %v311
  %385 = vmatprep.subr.bf16.mxu0 0
  %386 = vmatpush1.bf16.msra.mxu0 %v312
  %387 = vmatprep.subr.bf16.mxu0 0
  %388 = vmatpush1.bf16.msra.mxu0 %v313
  %389 = vmatprep.subr.bf16.mxu0 0
  %390 = vmatpush1.bf16.msra.mxu0 %v314
  %391 = vmatprep.subr.bf16.mxu0 0
  %392 = vmatpush1.bf16.msra.mxu0 %v315
  %393 = vmatprep.subr.bf16.mxu0 0
  %394 = vmatpush1.bf16.msra.mxu0 %v316
  %395 = vmatprep.subr.bf16.mxu0 0
  %396 = vmatpush1.bf16.msra.mxu0 %v317
  %397 = vmatprep.subr.bf16.mxu0 0
  %398 = vmatpush1.bf16.msra.mxu0 %v318
  %399 = vmatprep.mubr.bf16.mxu0 %v144
  %400 = vmatmul.mubr.bf16.gmra.mrb[0].mxu0 %v143
  %v401 = vpop.f32.mrb[0].mxu0
  %v402 = vadd.f32 0.0, %v401
  %v403 = vpop.f32.mrb[0].mxu0
  %v404 = vpop.f32.mrb[0].mxu0
  %v405 = vadd.f32 0.0, %v404
  %v406 = vpop.f32.mrb[0].mxu0
  %407 = vmatprep.mubr.bf16.mxu0 %v148
  %408 = vmatmul.mubr.bf16.gmra.mrb[0].mxu0 %v147
  %v409 = vpop.f32.mrb[0].mxu0
  %v410 = vadd.f32 0.0, %v409
  %v411 = vpop.f32.mrb[0].mxu0
  %v412 = vpop.f32.mrb[0].mxu0
  %v413 = vadd.f32 0.0, %v412
  %v414 = vpop.f32.mrb[0].mxu0
  %415 = vmatprep.mubr.bf16.mxu0 %v152
  %416 = vmatmul.mubr.bf16.gmra.mrb[0].mxu0 %v151
  %v417 = vpop.f32.mrb[0].mxu0
  %v418 = vadd.f32 0.0, %v417
  %v419 = vpop.f32.mrb[0].mxu0
  %v420 = vpop.f32.mrb[0].mxu0
  %v421 = vadd.f32 0.0, %v420
  %v422 = vpop.f32.mrb[0].mxu0
  %423 = vmatprep.mubr.bf16.mxu0 %v156
  %424 = vmatmul.mubr.bf16.gmra.mrb[0].mxu0 %v155
  %v425 = vpop.f32.mrb[0].mxu0
  %v426 = vadd.f32 0.0, %v425
  %v427 = vpop.f32.mrb[0].mxu0
  %v428 = vpop.f32.mrb[0].mxu0
  %v429 = vadd.f32 0.0, %v428
  %v430 = vpop.f32.mrb[0].mxu0
  %431 = vdwg.mxu0
  %432 = vmatprep.subr.bf16.mxu0 0
  %433 = vmatpush1.bf16.msra.mxu0 %v319
  %434 = vmatprep.subr.bf16.mxu0 0
  %435 = vmatpush1.bf16.msra.mxu0 %v320
  %436 = vmatprep.subr.bf16.mxu0 0
  %437 = vmatpush1.bf16.msra.mxu0 %v321
  %438 = vmatprep.subr.bf16.mxu0 0
  %439 = vmatpush1.bf16.msra.mxu0 %v322
  %440 = vmatprep.subr.bf16.mxu0 0
  %441 = vmatpush1.bf16.msra.mxu0 %v323
  %442 = vmatprep.subr.bf16.mxu0 0
  %443 = vmatpush1.bf16.msra.mxu0 %v324
  %444 = vmatprep.subr.bf16.mxu0 0
  %445 = vmatpush1.bf16.msra.mxu0 %v325
  %446 = vmatprep.subr.bf16.mxu0 0
  %447 = vmatpush1.bf16.msra.mxu0 %v326
  %448 = vmatprep.subr.bf16.mxu0 0
  %449 = vmatpush1.bf16.msra.mxu0 %v327
  %450 = vmatprep.subr.bf16.mxu0 0
  %451 = vmatpush1.bf16.msra.mxu0 %v328
  %452 = vmatprep.subr.bf16.mxu0 0
  %453 = vmatpush1.bf16.msra.mxu0 %v329
  %454 = vmatprep.subr.bf16.mxu0 0
  %455 = vmatpush1.bf16.msra.mxu0 %v330
  %456 = vmatprep.subr.bf16.mxu0 0
  %457 = vmatpush1.bf16.msra.mxu0 %v331
  %458 = vmatprep.subr.bf16.mxu0 0
  %459 = vmatpush1.bf16.msra.mxu0 %v332
  %460 = vmatprep.subr.bf16.mxu0 0
  %461 = vmatpush1.bf16.msra.mxu0 %v333
  %462 = vmatprep.subr.bf16.mxu0 0
  %463 = vmatpush1.bf16.msra.mxu0 %v334
  %464 = vmatprep.mubr.bf16.mxu0 %v146
  %465 = vmatmul.mubr.bf16.gmra.mrb[0].mxu0 %v145
  %v466 = vpop.f32.mrb[0].mxu0
  %v467 = vadd.f32 %v402, %v466
  %v468 = vpop.f32.mrb[0].mxu0
  %v469 = vpop.f32.mrb[0].mxu0
  %v470 = vadd.f32 %v405, %v469
  %v471 = vpop.f32.mrb[0].mxu0
  %472 = vmatprep.mubr.bf16.mxu0 %v150
  %473 = vmatmul.mubr.bf16.gmra.mrb[0].mxu0 %v149
  %v474 = vpop.f32.mrb[0].mxu0
  %v475 = vadd.f32 %v410, %v474
  %v476 = vpop.f32.mrb[0].mxu0
  %v477 = vpop.f32.mrb[0].mxu0
  %v478 = vadd.f32 %v413, %v477
  %v479 = vpop.f32.mrb[0].mxu0
  %480 = vmatprep.mubr.bf16.mxu0 %v154
  %481 = vmatmul.mubr.bf16.gmra.mrb[0].mxu0 %v153
  %v482 = vpop.f32.mrb[0].mxu0
  %v483 = vadd.f32 %v418, %v482
  %v484 = vpop.f32.mrb[0].mxu0
  %v485 = vpop.f32.mrb[0].mxu0
  %v486 = vadd.f32 %v421, %v485
  %v487 = vpop.f32.mrb[0].mxu0
  %488 = vmatprep.mubr.bf16.mxu0 %v158
  %489 = vmatmul.mubr.bf16.gmra.mrb[0].mxu0 %v157
  %v490 = vpop.f32.mrb[0].mxu0
  %v491 = vadd.f32 %v426, %v490
  %v492 = vpop.f32.mrb[0].mxu0
  %v493 = vpop.f32.mrb[0].mxu0
  %v494 = vadd.f32 %v429, %v493
  %v495 = vpop.f32.mrb[0].mxu0
  %496 = vdwg.mxu0
  %v497 = vmax.f32 %v467, %v475
  %v498 = vmax.f32 %v470, %v478
  %v499 = vmax.f32 %v497, %v483
  %v500 = vmax.f32 %v498, %v486
  %v501 = vmax.f32 %v499, %v491
  %v502 = vmax.f32 %v500, %v494
  %v503 = vld [vmem:[%s2] sm:$0x1]
  %v505 = vlaneseq
  %v506 = vshrl.u32 %v505, 7
  %v507 = vsub.s32 0, %v506
  %v508 = vrot.slane %v503, %v507
  %v510 = vadd.f32 %v501, %v508
  %v511 = vadd.f32 %v502, %v508
  %v512 = vmax.f32 %v510, 0.0
  %v513 = vmax.f32 %v511, 0.0
  %v514 = vpack.c.bf16 %v513, %v512
  %v516 = vunpack.c.l.b16 %v514
  %v517 = vunpack.c.h.b16 %v514
  %v518 = vpack.c.b16 %v516, %v516
  %v519 = vpack.c.b16 %v517, %v517
  %522 = vst [vmem:[%s3] sm:$0xf] %v518
  %523 = vst [vmem:[%s3 + $0x4] sm:$0xf] %v519
  // Predicated region
  $region14: #{lenet_forward.4} parent=0 // pred_check
    _
  $region15: #{lenet_forward.4} parent=0 // pred_check_branch
    %525 = sbr.rel (0) target = $region17
  $region16: #{lenet_forward.4} parent=0 // pred_region
    _
  $region17: #{lenet_forward.4} parent=0 // pred_fallthru
    _
  // Predicated region
  $region18: #{lenet_forward.4} parent=0 // pred_check
    _
  $region19: #{lenet_forward.4} parent=0 // pred_check_branch
    %527 = sbr.rel (0) target = $region21
  $region20: #{lenet_forward.4} parent=0 // pred_region
    _
  $region21: #{lenet_forward.4} parent=0 // pred_fallthru
    _

// kernel: lenet_forward.5
$region0: #{lenet_forward.5}
  #allocation0 [shape = 'u32[]', space=smem, size = 0x4, offset = 0x4, fixed_abs, tag = 'smem constant byte address 0x4 - core index']
  #allocation1 [shape = 'u32[144,128]{1,0:T(1,128)}', space=vmem, size = 0x12000, scoped, tag = 'internal scratch']
  %s0 = inlined_call_operand.vmem [shape: bf16[16,128], index: 0, kind: input, shape index: {}]
  %s1 = inlined_call_operand.vmem [shape: bf16[128,512], index: 1, kind: input, shape index: {}]
  %s2 = inlined_call_operand.vmem [shape: f32[1,512], index: 2, kind: input, shape index: {}]
  %s3 = inlined_call_operand.vmem [shape: bf16[512,128], index: 3, kind: input, shape index: {}]
  %s4 = inlined_call_operand.vmem [shape: f32[1,128], index: 4, kind: input, shape index: {}]
  %s5 = inlined_call_operand.vmem [shape: f32[16,128], index: 5, kind: output, shape index: {}]
  %s6 = sld [smem:[#allocation0]]
  $region30: #{lenet_forward.5} parent=0
    _
  %s8 = ssub.s32 1, %s6
  %s9 = scalar_select 0, %s8, %s6
  // Predicated region
  $region2: #{lenet_forward.5} parent=0 // pred_check
    _
  $region3: #{lenet_forward.5} parent=0 // pred_check_branch
    %11 = sbr.rel (0) target = $region5
  $region4: #{lenet_forward.5} parent=0 // pred_region
    _
  $region5: #{lenet_forward.5} parent=0 // pred_fallthru
    _
  // Predicated region
  $region6: #{lenet_forward.5} parent=0 // pred_check
    _
  $region7: #{lenet_forward.5} parent=0 // pred_check_branch
    %13 = sbr.rel (0) target = $region9
  $region8: #{lenet_forward.5} parent=0 // pred_region
    _
  $region9: #{lenet_forward.5} parent=0 // pred_fallthru
    _
  // Predicated region
  $region10: #{lenet_forward.5} parent=0 // pred_check
    _
  $region11: #{lenet_forward.5} parent=0 // pred_check_branch
    %15 = sbr.rel (0) target = $region13
  $region12: #{lenet_forward.5} parent=0 // pred_region
    _
  $region13: #{lenet_forward.5} parent=0 // pred_fallthru
    _
  // Predicated region
  $region14: #{lenet_forward.5} parent=0 // pred_check
    _
  $region15: #{lenet_forward.5} parent=0 // pred_check_branch
    %17 = sbr.rel (0) target = $region17
  $region16: #{lenet_forward.5} parent=0 // pred_region
    _
  $region17: #{lenet_forward.5} parent=0 // pred_fallthru
    _
  // Predicated region
  $region18: #{lenet_forward.5} parent=0 // pred_check
    _
  $region19: #{lenet_forward.5} parent=0 // pred_check_branch
    %19 = sbr.rel (0) target = $region21
  $region20: #{lenet_forward.5} parent=0 // pred_region
    _
  $region21: #{lenet_forward.5} parent=0 // pred_fallthru
    _
  %v21 = vld [vmem:[%s0] sm:$0xf]
  %v22 = vld [vmem:[%s0 + $0x4] sm:$0xf]
  %v23 = vld [vmem:[%s1] sm:$0xff]
  %v24 = vld [vmem:[%s1 + $0x8] sm:$0xff]
  %v25 = vld [vmem:[%s1 + $0x10] sm:$0xff]
  %v26 = vld [vmem:[%s1 + $0x18] sm:$0xff]
  %v27 = vld [vmem:[%s1 + $0x20] sm:$0xff]
  %v28 = vld [vmem:[%s1 + $0x28] sm:$0xff]
  %v29 = vld [vmem:[%s1 + $0x30] sm:$0xff]
  %v30 = vld [vmem:[%s1 + $0x38] sm:$0xff]
  %v31 = vld [vmem:[%s1 + $0x40] sm:$0xff]
  %v32 = vld [vmem:[%s1 + $0x48] sm:$0xff]
  %v33 = vld [vmem:[%s1 + $0x50] sm:$0xff]
  %v34 = vld [vmem:[%s1 + $0x58] sm:$0xff]
  %v35 = vld [vmem:[%s1 + $0x60] sm:$0xff]
  %v36 = vld [vmem:[%s1 + $0x68] sm:$0xff]
  %v37 = vld [vmem:[%s1 + $0x70] sm:$0xff]
  %v38 = vld [vmem:[%s1 + $0x78] sm:$0xff]
  %v39 = vld [vmem:[%s1 + $0x80] sm:$0xff]
  %v40 = vld [vmem:[%s1 + $0x88] sm:$0xff]
  %v41 = vld [vmem:[%s1 + $0x90] sm:$0xff]
  %v42 = vld [vmem:[%s1 + $0x98] sm:$0xff]
  %v43 = vld [vmem:[%s1 + $0xa0] sm:$0xff]
  %v44 = vld [vmem:[%s1 + $0xa8] sm:$0xff]
  %v45 = vld [vmem:[%s1 + $0xb0] sm:$0xff]
  %v46 = vld [vmem:[%s1 + $0xb8] sm:$0xff]
  %v47 = vld [vmem:[%s1 + $0xc0] sm:$0xff]
  %v48 = vld [vmem:[%s1 + $0xc8] sm:$0xff]
  %v49 = vld [vmem:[%s1 + $0xd0] sm:$0xff]
  %v50 = vld [vmem:[%s1 + $0xd8] sm:$0xff]
  %v51 = vld [vmem:[%s1 + $0xe0] sm:$0xff]
  %v52 = vld [vmem:[%s1 + $0xe8] sm:$0xff]
  %v53 = vld [vmem:[%s1 + $0xf0] sm:$0xff]
  %v54 = vld [vmem:[%s1 + $0xf8] sm:$0xff]
  %v55 = vld [vmem:[%s2] sm:$0xf]
  %v57 = vlaneseq
  %v58 = vshrl.u32 %v57, 7
  %v59 = vsub.s32 0, %v58
  %v60 = vrot.slane %v55, %v59
  %v61 = vlaneseq
  %v62 = vshrl.u32 %v61, 7
  %v63 = vsub.s32 1, %v62
  %v64 = vrot.slane %v55, %v63
  %v65 = vlaneseq
  %v66 = vshrl.u32 %v65, 7
  %v67 = vsub.s32 2, %v66
  %v68 = vrot.slane %v55, %v67
  %v69 = vlaneseq
  %v70 = vshrl.u32 %v69, 7
  %v71 = vsub.s32 3, %v70
  %v72 = vrot.slane %v55, %v71
  %v79 = vunpack.c.l.b16 %v21
  %v80 = vunpack.c.l.b16 %v22
  %v81 = vpack.c.b16 %v80, %v79
  %v115 = vunpack.c.l.b16 %v23
  %v116 = vunpack.c.h.b16 %v23
  %v117 = vunpack.c.l.b16 %v24
  %v118 = vunpack.c.h.b16 %v24
  %v119 = vunpack.c.l.b16 %v25
  %v120 = vunpack.c.h.b16 %v25
  %v121 = vunpack.c.l.b16 %v26
  %v122 = vunpack.c.h.b16 %v26
  %v123 = vunpack.c.l.b16 %v27
  %v124 = vunpack.c.h.b16 %v27
  %v125 = vunpack.c.l.b16 %v28
  %v126 = vunpack.c.h.b16 %v28
  %v127 = vunpack.c.l.b16 %v29
  %v128 = vunpack.c.h.b16 %v29
  %v129 = vunpack.c.l.b16 %v30
  %v130 = vunpack.c.h.b16 %v30
  %v131 = vunpack.c.l.b16 %v31
  %v132 = vunpack.c.h.b16 %v31
  %v133 = vunpack.c.l.b16 %v32
  %v134 = vunpack.c.h.b16 %v32
  %v135 = vunpack.c.l.b16 %v33
  %v136 = vunpack.c.h.b16 %v33
  %v137 = vunpack.c.l.b16 %v34
  %v138 = vunpack.c.h.b16 %v34
  %v139 = vunpack.c.l.b16 %v35
  %v140 = vunpack.c.h.b16 %v35
  %v141 = vunpack.c.l.b16 %v36
  %v142 = vunpack.c.h.b16 %v36
  %v143 = vunpack.c.l.b16 %v37
  %v144 = vunpack.c.h.b16 %v37
  %v145 = vunpack.c.l.b16 %v38
  %v146 = vunpack.c.h.b16 %v38
  %v147 = vunpack.c.l.b16 %v39
  %v148 = vunpack.c.h.b16 %v39
  %v149 = vunpack.c.l.b16 %v40
  %v150 = vunpack.c.h.b16 %v40
  %v151 = vunpack.c.l.b16 %v41
  %v152 = vunpack.c.h.b16 %v41
  %v153 = vunpack.c.l.b16 %v42
  %v154 = vunpack.c.h.b16 %v42
  %v155 = vunpack.c.l.b16 %v43
  %v156 = vunpack.c.h.b16 %v43
  %v157 = vunpack.c.l.b16 %v44
  %v158 = vunpack.c.h.b16 %v44
  %v159 = vunpack.c.l.b16 %v45
  %v160 = vunpack.c.h.b16 %v45
  %v161 = vunpack.c.l.b16 %v46
  %v162 = vunpack.c.h.b16 %v46
  %v163 = vunpack.c.l.b16 %v47
  %v164 = vunpack.c.h.b16 %v47
  %v165 = vunpack.c.l.b16 %v48
  %v166 = vunpack.c.h.b16 %v48
  %v167 = vunpack.c.l.b16 %v49
  %v168 = vunpack.c.h.b16 %v49
  %v169 = vunpack.c.l.b16 %v50
  %v170 = vunpack.c.h.b16 %v50
  %v171 = vunpack.c.l.b16 %v51
  %v172 = vunpack.c.h.b16 %v51
  %v173 = vunpack.c.l.b16 %v52
  %v174 = vunpack.c.h.b16 %v52
  %v175 = vunpack.c.l.b16 %v53
  %v176 = vunpack.c.h.b16 %v53
  %v177 = vunpack.c.l.b16 %v54
  %v178 = vunpack.c.h.b16 %v54
  %v179 = vpack.c.b16 %v119, %v115
  %v180 = vpack.c.b16 %v120, %v116
  %v181 = vpack.c.b16 %v121, %v117
  %v182 = vpack.c.b16 %v122, %v118
  %v183 = vpack.c.b16 %v127, %v123
  %v184 = vpack.c.b16 %v128, %v124
  %v185 = vpack.c.b16 %v129, %v125
  %v186 = vpack.c.b16 %v130, %v126
  %v187 = vpack.c.b16 %v135, %v131
  %v188 = vpack.c.b16 %v136, %v132
  %v189 = vpack.c.b16 %v137, %v133
  %v190 = vpack.c.b16 %v138, %v134
  %v191 = vpack.c.b16 %v143, %v139
  %v192 = vpack.c.b16 %v144, %v140
  %v193 = vpack.c.b16 %v145, %v141
  %v194 = vpack.c.b16 %v146, %v142
  %v195 = vpack.c.b16 %v151, %v147
  %v196 = vpack.c.b16 %v152, %v148
  %v197 = vpack.c.b16 %v153, %v149
  %v198 = vpack.c.b16 %v154, %v150
  %v199 = vpack.c.b16 %v159, %v155
  %v200 = vpack.c.b16 %v160, %v156
  %v201 = vpack.c.b16 %v161, %v157
  %v202 = vpack.c.b16 %v162, %v158
  %v203 = vpack.c.b16 %v167, %v163
  %v204 = vpack.c.b16 %v168, %v164
  %v205 = vpack.c.b16 %v169, %v165
  %v206 = vpack.c.b16 %v170, %v166
  %v207 = vpack.c.b16 %v175, %v171
  %v208 = vpack.c.b16 %v176, %v172
  %v209 = vpack.c.b16 %v177, %v173
  %v210 = vpack.c.b16 %v178, %v174
  %243 = vmatprep.subr.bf16.mxu0 %v180
  %244 = vmatpush1.bf16.msra.mxu0 %v179
  %245 = vmatprep.subr.bf16.mxu0 %v184
  %246 = vmatpush1.bf16.msra.mxu0 %v183
  %247 = vmatprep.subr.bf16.mxu0 %v188
  %248 = vmatpush1.bf16.msra.mxu0 %v187
  %249 = vmatprep.subr.bf16.mxu0 %v192
  %250 = vmatpush1.bf16.msra.mxu0 %v191
  %251 = vmatprep.subr.bf16.mxu0 %v196
  %252 = vmatpush1.bf16.msra.mxu0 %v195
  %253 = vmatprep.subr.bf16.mxu0 %v200
  %254 = vmatpush1.bf16.msra.mxu0 %v199
  %255 = vmatprep.subr.bf16.mxu0 %v204
  %256 = vmatpush1.bf16.msra.mxu0 %v203
  %257 = vmatprep.subr.bf16.mxu0 %v208
  %258 = vmatpush1.bf16.msra.mxu0 %v207
  %259 = vmatprep.subr.bf16.mxu0 0
  %260 = vmatpush1.bf16.msra.mxu0 0
  %261 = vmatprep.subr.bf16.mxu0 0
  %262 = vmatpush1.bf16.msra.mxu0 0
  %263 = vmatprep.subr.bf16.mxu0 0
  %264 = vmatpush1.bf16.msra.mxu0 0
  %265 = vmatprep.subr.bf16.mxu0 0
  %266 = vmatpush1.bf16.msra.mxu0 0
  %267 = vmatprep.subr.bf16.mxu0 0
  %268 = vmatpush1.bf16.msra.mxu0 0
  %269 = vmatprep.subr.bf16.mxu0 0
  %270 = vmatpush1.bf16.msra.mxu0 0
  %271 = vmatprep.subr.bf16.mxu0 0
  %272 = vmatpush1.bf16.msra.mxu0 0
  %273 = vmatprep.subr.bf16.mxu0 0
  %274 = vmatpush1.bf16.msra.mxu0 0
  %275 = vmatprep.mubr.bf16.mxu0 0
  %276 = vmatmul.mubr.bf16.gmra.mrb[0].mxu0 %v81
  %v277 = vpop.f32.mrb[0].mxu0
  %v278 = vadd.f32 %v60, %v277
  %v279 = vpop.f32.mrb[0].mxu0
  %v280 = vadd.f32 %v64, %v279
  %v281 = vpop.f32.mrb[0].mxu0
  %v282 = vadd.f32 %v60, %v281
  %v283 = vpop.f32.mrb[0].mxu0
  %v284 = vadd.f32 %v64, %v283
  %285 = vdwg.mxu0
  %286 = vmatprep.subr.bf16.mxu0 %v182
  %287 = vmatpush1.bf16.msra.mxu0 %v181
  %288 = vmatprep.subr.bf16.mxu0 %v186
  %289 = vmatpush1.bf16.msra.mxu0 %v185
  %290 = vmatprep.subr.bf16.mxu0 %v190
  %291 = vmatpush1.bf16.msra.mxu0 %v189
  %292 = vmatprep.subr.bf16.mxu0 %v194
  %293 = vmatpush1.bf16.msra.mxu0 %v193
  %294 = vmatprep.subr.bf16.mxu0 %v198
  %295 = vmatpush1.bf16.msra.mxu0 %v197
  %296 = vmatprep.subr.bf16.mxu0 %v202
  %297 = vmatpush1.bf16.msra.mxu0 %v201
  %298 = vmatprep.subr.bf16.mxu0 %v206
  %299 = vmatpush1.bf16.msra.mxu0 %v205
  %300 = vmatprep.subr.bf16.mxu0 %v210
  %301 = vmatpush1.bf16.msra.mxu0 %v209
  %302 = vmatprep.subr.bf16.mxu0 0
  %303 = vmatpush1.bf16.msra.mxu0 0
  %304 = vmatprep.subr.bf16.mxu0 0
  %305 = vmatpush1.bf16.msra.mxu0 0
  %306 = vmatprep.subr.bf16.mxu0 0
  %307 = vmatpush1.bf16.msra.mxu0 0
  %308 = vmatprep.subr.bf16.mxu0 0
  %309 = vmatpush1.bf16.msra.mxu0 0
  %310 = vmatprep.subr.bf16.mxu0 0
  %311 = vmatpush1.bf16.msra.mxu0 0
  %312 = vmatprep.subr.bf16.mxu0 0
  %313 = vmatpush1.bf16.msra.mxu0 0
  %314 = vmatprep.subr.bf16.mxu0 0
  %315 = vmatpush1.bf16.msra.mxu0 0
  %316 = vmatprep.subr.bf16.mxu0 0
  %317 = vmatpush1.bf16.msra.mxu0 0
  %318 = vmatprep.mubr.bf16.mxu0 0
  %319 = vmatmul.mubr.bf16.gmra.mrb[0].mxu0 %v81
  %v320 = vpop.f32.mrb[0].mxu0
  %v321 = vadd.f32 %v68, %v320
  %v322 = vpop.f32.mrb[0].mxu0
  %v323 = vadd.f32 %v72, %v322
  %v324 = vpop.f32.mrb[0].mxu0
  %v325 = vadd.f32 %v68, %v324
  %v326 = vpop.f32.mrb[0].mxu0
  %v327 = vadd.f32 %v72, %v326
  %328 = vdwg.mxu0
  %v329 = vmax.f32 %v278, 0.0
  %v330 = vmax.f32 %v280, 0.0
  %v331 = vmax.f32 %v321, 0.0
  %v332 = vmax.f32 %v323, 0.0
  %v333 = vmax.f32 %v282, 0.0
  %v334 = vmax.f32 %v284, 0.0
  %v335 = vmax.f32 %v325, 0.0
  %v336 = vmax.f32 %v327, 0.0
  %v337 = vpack.c.bf16 %v333, %v329
  %v338 = vpack.c.bf16 %v334, %v330
  %v339 = vpack.c.bf16 %v335, %v331
  %v340 = vpack.c.bf16 %v336, %v332
  %v341 = vld [vmem:[%s3] sm:$0xf]
  %v342 = vld [vmem:[%s3 + $0x4] sm:$0xf]
  %v343 = vld [vmem:[%s3 + $0x8] sm:$0xf]
  %v344 = vld [vmem:[%s3 + $0xc] sm:$0xf]
  %v345 = vld [vmem:[%s3 + $0x10] sm:$0xf]
  %v346 = vld [vmem:[%s3 + $0x14] sm:$0xf]
  %v347 = vld [vmem:[%s3 + $0x18] sm:$0xf]
  %v348 = vld [vmem:[%s3 + $0x1c] sm:$0xf]
  %v349 = vld [vmem:[%s3 + $0x20] sm:$0xf]
  %v350 = vld [vmem:[%s3 + $0x24] sm:$0xf]
  %v351 = vld [vmem:[%s3 + $0x28] sm:$0xf]
  %v352 = vld [vmem:[%s3 + $0x2c] sm:$0xf]
  %v353 = vld [vmem:[%s3 + $0x30] sm:$0xf]
  %v354 = vld [vmem:[%s3 + $0x34] sm:$0xf]
  %v355 = vld [vmem:[%s3 + $0x38] sm:$0xf]
  %v356 = vld [vmem:[%s3 + $0x3c] sm:$0xf]
  %v357 = vld [vmem:[%s3 + $0x40] sm:$0xf]
  %v358 = vld [vmem:[%s3 + $0x44] sm:$0xf]
  %v359 = vld [vmem:[%s3 + $0x48] sm:$0xf]
  %v360 = vld [vmem:[%s3 + $0x4c] sm:$0xf]
  %v361 = vld [vmem:[%s3 + $0x50] sm:$0xf]
  %v362 = vld [vmem:[%s3 + $0x54] sm:$0xf]
  %v363 = vld [vmem:[%s3 + $0x58] sm:$0xf]
  %v364 = vld [vmem:[%s3 + $0x5c] sm:$0xf]
  %v365 = vld [vmem:[%s3 + $0x60] sm:$0xf]
  %v366 = vld [vmem:[%s3 + $0x64] sm:$0xf]
  %v367 = vld [vmem:[%s3 + $0x68] sm:$0xf]
  %v368 = vld [vmem:[%s3 + $0x6c] sm:$0xf]
  %v369 = vld [vmem:[%s3 + $0x70] sm:$0xf]
  %v370 = vld [vmem:[%s3 + $0x74] sm:$0xf]
  %v371 = vld [vmem:[%s3 + $0x78] sm:$0xf]
  %v372 = vld [vmem:[%s3 + $0x7c] sm:$0xf]
  %v373 = vld [vmem:[%s3 + $0x80] sm:$0xf]
  %v374 = vld [vmem:[%s3 + $0x84] sm:$0xf]
  %v375 = vld [vmem:[%s3 + $0x88] sm:$0xf]
  %v376 = vld [vmem:[%s3 + $0x8c] sm:$0xf]
  %v377 = vld [vmem:[%s3 + $0x90] sm:$0xf]
  %v378 = vld [vmem:[%s3 + $0x94] sm:$0xf]
  %v379 = vld [vmem:[%s3 + $0x98] sm:$0xf]
  %v380 = vld [vmem:[%s3 + $0x9c] sm:$0xf]
  %v381 = vld [vmem:[%s3 + $0xa0] sm:$0xf]
  %v382 = vld [vmem:[%s3 + $0xa4] sm:$0xf]
  %v383 = vld [vmem:[%s3 + $0xa8] sm:$0xf]
  %v384 = vld [vmem:[%s3 + $0xac] sm:$0xf]
  %v385 = vld [vmem:[%s3 + $0xb0] sm:$0xf]
  %v386 = vld [vmem:[%s3 + $0xb4] sm:$0xf]
  %v387 = vld [vmem:[%s3 + $0xb8] sm:$0xf]
  %v388 = vld [vmem:[%s3 + $0xbc] sm:$0xf]
  %v389 = vld [vmem:[%s3 + $0xc0] sm:$0xf]
  %v390 = vld [vmem:[%s3 + $0xc4] sm:$0xf]
  %v391 = vld [vmem:[%s3 + $0xc8] sm:$0xf]
  %v392 = vld [vmem:[%s3 + $0xcc] sm:$0xf]
  %v393 = vld [vmem:[%s3 + $0xd0] sm:$0xf]
  %v394 = vld [vmem:[%s3 + $0xd4] sm:$0xf]
  %v395 = vld [vmem:[%s3 + $0xd8] sm:$0xf]
  %v396 = vld [vmem:[%s3 + $0xdc] sm:$0xf]
  %v397 = vld [vmem:[%s3 + $0xe0] sm:$0xf]
  %v398 = vld [vmem:[%s3 + $0xe4] sm:$0xf]
  %v399 = vld [vmem:[%s3 + $0xe8] sm:$0xf]
  %v400 = vld [vmem:[%s3 + $0xec] sm:$0xf]
  %v401 = vld [vmem:[%s3 + $0xf0] sm:$0xf]
  %v402 = vld [vmem:[%s3 + $0xf4] sm:$0xf]
  %v403 = vld [vmem:[%s3 + $0xf8] sm:$0xf]
  %v404 = vld [vmem:[%s3 + $0xfc] sm:$0xf]
  %v405 = vld [vmem:[%s4] sm:$0x1]
  %v407 = vlaneseq
  %v408 = vshrl.u32 %v407, 7
  %v409 = vsub.s32 0, %v408
  %v410 = vrot.slane %v405, %v409
  %v476 = vunpack.c.l.b16 %v341
  %v477 = vunpack.c.l.b16 %v342
  %v478 = vunpack.c.l.b16 %v343
  %v479 = vunpack.c.l.b16 %v344
  %v480 = vunpack.c.l.b16 %v345
  %v481 = vunpack.c.l.b16 %v346
  %v482 = vunpack.c.l.b16 %v347
  %v483 = vunpack.c.l.b16 %v348
  %v484 = vunpack.c.l.b16 %v349
  %v485 = vunpack.c.l.b16 %v350
  %v486 = vunpack.c.l.b16 %v351
  %v487 = vunpack.c.l.b16 %v352
  %v488 = vunpack.c.l.b16 %v353
  %v489 = vunpack.c.l.b16 %v354
  %v490 = vunpack.c.l.b16 %v355
  %v491 = vunpack.c.l.b16 %v356
  %v492 = vunpack.c.l.b16 %v357
  %v493 = vunpack.c.l.b16 %v358
  %v494 = vunpack.c.l.b16 %v359
  %v495 = vunpack.c.l.b16 %v360
  %v496 = vunpack.c.l.b16 %v361
  %v497 = vunpack.c.l.b16 %v362
  %v498 = vunpack.c.l.b16 %v363
  %v499 = vunpack.c.l.b16 %v364
  %v500 = vunpack.c.l.b16 %v365
  %v501 = vunpack.c.l.b16 %v366
  %v502 = vunpack.c.l.b16 %v367
  %v503 = vunpack.c.l.b16 %v368
  %v504 = vunpack.c.l.b16 %v369
  %v505 = vunpack.c.l.b16 %v370
  %v506 = vunpack.c.l.b16 %v371
  %v507 = vunpack.c.l.b16 %v372
  %v508 = vunpack.c.l.b16 %v373
  %v509 = vunpack.c.l.b16 %v374
  %v510 = vunpack.c.l.b16 %v375
  %v511 = vunpack.c.l.b16 %v376
  %v512 = vunpack.c.l.b16 %v377
  %v513 = vunpack.c.l.b16 %v378
  %v514 = vunpack.c.l.b16 %v379
  %v515 = vunpack.c.l.b16 %v380
  %v516 = vunpack.c.l.b16 %v381
  %v517 = vunpack.c.l.b16 %v382
  %v518 = vunpack.c.l.b16 %v383
  %v519 = vunpack.c.l.b16 %v384
  %v520 = vunpack.c.l.b16 %v385
  %v521 = vunpack.c.l.b16 %v386
  %v522 = vunpack.c.l.b16 %v387
  %v523 = vunpack.c.l.b16 %v388
  %v524 = vunpack.c.l.b16 %v389
  %v525 = vunpack.c.l.b16 %v390
  %v526 = vunpack.c.l.b16 %v391
  %v527 = vunpack.c.l.b16 %v392
  %v528 = vunpack.c.l.b16 %v393
  %v529 = vunpack.c.l.b16 %v394
  %v530 = vunpack.c.l.b16 %v395
  %v531 = vunpack.c.l.b16 %v396
  %v532 = vunpack.c.l.b16 %v397
  %v533 = vunpack.c.l.b16 %v398
  %v534 = vunpack.c.l.b16 %v399
  %v535 = vunpack.c.l.b16 %v400
  %v536 = vunpack.c.l.b16 %v401
  %v537 = vunpack.c.l.b16 %v402
  %v538 = vunpack.c.l.b16 %v403
  %v539 = vunpack.c.l.b16 %v404
  %v540 = vpack.c.b16 %v477, %v476
  %v541 = vpack.c.b16 %v479, %v478
  %v542 = vpack.c.b16 %v481, %v480
  %v543 = vpack.c.b16 %v483, %v482
  %v544 = vpack.c.b16 %v485, %v484
  %v545 = vpack.c.b16 %v487, %v486
  %v546 = vpack.c.b16 %v489, %v488
  %v547 = vpack.c.b16 %v491, %v490
  %v548 = vpack.c.b16 %v493, %v492
  %v549 = vpack.c.b16 %v495, %v494
  %v550 = vpack.c.b16 %v497, %v496
  %v551 = vpack.c.b16 %v499, %v498
  %v552 = vpack.c.b16 %v501, %v500
  %v553 = vpack.c.b16 %v503, %v502
  %v554 = vpack.c.b16 %v505, %v504
  %v555 = vpack.c.b16 %v507, %v506
  %v556 = vpack.c.b16 %v509, %v508
  %v557 = vpack.c.b16 %v511, %v510
  %v558 = vpack.c.b16 %v513, %v512
  %v559 = vpack.c.b16 %v515, %v514
  %v560 = vpack.c.b16 %v517, %v516
  %v561 = vpack.c.b16 %v519, %v518
  %v562 = vpack.c.b16 %v521, %v520
  %v563 = vpack.c.b16 %v523, %v522
  %v564 = vpack.c.b16 %v525, %v524
  %v565 = vpack.c.b16 %v527, %v526
  %v566 = vpack.c.b16 %v529, %v528
  %v567 = vpack.c.b16 %v531, %v530
  %v568 = vpack.c.b16 %v533, %v532
  %v569 = vpack.c.b16 %v535, %v534
  %v570 = vpack.c.b16 %v537, %v536
  %v571 = vpack.c.b16 %v539, %v538
  %604 = vmatprep.subr.bf16.mxu0 0
  %605 = vmatpush1.bf16.msra.mxu0 %v540
  %606 = vmatprep.subr.bf16.mxu0 0
  %607 = vmatpush1.bf16.msra.mxu0 %v541
  %608 = vmatprep.subr.bf16.mxu0 0
  %609 = vmatpush1.bf16.msra.mxu0 %v542
  %610 = vmatprep.subr.bf16.mxu0 0
  %611 = vmatpush1.bf16.msra.mxu0 %v543
  %612 = vmatprep.subr.bf16.mxu0 0
  %613 = vmatpush1.bf16.msra.mxu0 %v544
  %614 = vmatprep.subr.bf16.mxu0 0
  %615 = vmatpush1.bf16.msra.mxu0 %v545
  %616 = vmatprep.subr.bf16.mxu0 0
  %617 = vmatpush1.bf16.msra.mxu0 %v546
  %618 = vmatprep.subr.bf16.mxu0 0
  %619 = vmatpush1.bf16.msra.mxu0 %v547
  %620 = vmatprep.subr.bf16.mxu0 0
  %621 = vmatpush1.bf16.msra.mxu0 %v548
  %622 = vmatprep.subr.bf16.mxu0 0
  %623 = vmatpush1.bf16.msra.mxu0 %v549
  %624 = vmatprep.subr.bf16.mxu0 0
  %625 = vmatpush1.bf16.msra.mxu0 %v550
  %626 = vmatprep.subr.bf16.mxu0 0
  %627 = vmatpush1.bf16.msra.mxu0 %v551
  %628 = vmatprep.subr.bf16.mxu0 0
  %629 = vmatpush1.bf16.msra.mxu0 %v552
  %630 = vmatprep.subr.bf16.mxu0 0
  %631 = vmatpush1.bf16.msra.mxu0 %v553
  %632 = vmatprep.subr.bf16.mxu0 0
  %633 = vmatpush1.bf16.msra.mxu0 %v554
  %634 = vmatprep.subr.bf16.mxu0 0
  %635 = vmatpush1.bf16.msra.mxu0 %v555
  %636 = vmatprep.mubr.bf16.mxu0 %v338
  %637 = vmatmul.mubr.bf16.gmra.mrb[0].mxu0 %v337
  %v638 = vpop.f32.mrb[0].mxu0
  %v639 = vadd.f32 %v410, %v638
  %v640 = vpop.f32.mrb[0].mxu0
  %v641 = vpop.f32.mrb[0].mxu0
  %v642 = vadd.f32 %v410, %v641
  %v643 = vpop.f32.mrb[0].mxu0
  %644 = vdwg.mxu0
  %645 = vmatprep.subr.bf16.mxu0 0
  %646 = vmatpush1.bf16.msra.mxu0 %v556
  %647 = vmatprep.subr.bf16.mxu0 0
  %648 = vmatpush1.bf16.msra.mxu0 %v557
  %649 = vmatprep.subr.bf16.mxu0 0
  %650 = vmatpush1.bf16.msra.mxu0 %v558
  %651 = vmatprep.subr.bf16.mxu0 0
  %652 = vmatpush1.bf16.msra.mxu0 %v559
  %653 = vmatprep.subr.bf16.mxu0 0
  %654 = vmatpush1.bf16.msra.mxu0 %v560
  %655 = vmatprep.subr.bf16.mxu0 0
  %656 = vmatpush1.bf16.msra.mxu0 %v561
  %657 = vmatprep.subr.bf16.mxu0 0
  %658 = vmatpush1.bf16.msra.mxu0 %v562
  %659 = vmatprep.subr.bf16.mxu0 0
  %660 = vmatpush1.bf16.msra.mxu0 %v563
  %661 = vmatprep.subr.bf16.mxu0 0
  %662 = vmatpush1.bf16.msra.mxu0 %v564
  %663 = vmatprep.subr.bf16.mxu0 0
  %664 = vmatpush1.bf16.msra.mxu0 %v565
  %665 = vmatprep.subr.bf16.mxu0 0
  %666 = vmatpush1.bf16.msra.mxu0 %v566
  %667 = vmatprep.subr.bf16.mxu0 0
  %668 = vmatpush1.bf16.msra.mxu0 %v567
  %669 = vmatprep.subr.bf16.mxu0 0
  %670 = vmatpush1.bf16.msra.mxu0 %v568
  %671 = vmatprep.subr.bf16.mxu0 0
  %672 = vmatpush1.bf16.msra.mxu0 %v569
  %673 = vmatprep.subr.bf16.mxu0 0
  %674 = vmatpush1.bf16.msra.mxu0 %v570
  %675 = vmatprep.subr.bf16.mxu0 0
  %676 = vmatpush1.bf16.msra.mxu0 %v571
  %677 = vmatprep.mubr.bf16.mxu0 %v340
  %678 = vmatmul.mubr.bf16.gmra.mrb[0].mxu0 %v339
  %v679 = vpop.f32.mrb[0].mxu0
  %v680 = vadd.f32 %v639, %v679
  %v681 = vpop.f32.mrb[0].mxu0
  %v682 = vpop.f32.mrb[0].mxu0
  %v683 = vadd.f32 %v642, %v682
  %v684 = vpop.f32.mrb[0].mxu0
  %685 = vdwg.mxu0
  %v686 = vlaneseq
  %v687 = vand.u32 %v686, 127
  %vm688 = vcmp.lt.s32.totalorder %v687, 10
  %v689 = vsel %vm688, %v680, -inf
  %v690 = vsel %vm688, %v683, -inf
  %691 = vmax.xlane.f32.xlu0 %v689
  %v692 = vpop.xlane.xlu0 %691
  %693 = vmax.xlane.f32.xlu0 %v690
  %v694 = vpop.xlane.xlu0 %693
  %v695 = vsub.f32 %v689, %v692
  %v696 = vsub.f32 %v690, %v694
  %v697 = vmul.f32 %v695, 1.442695
  %v698 = vpow.pop %v697
  %v699 = vmul.f32 %v696, 1.442695
  %v700 = vpow.pop %v699
  %701 = vadd.xlane.f32.xlu0 %v698
  %v702 = vpop.xlane.xlu0 %701
  %703 = vadd.xlane.f32.xlu0 %v700
  %v704 = vpop.xlane.xlu0 %703
  %v705 = vlog2.pop %v702
  %v706 = vmul.f32 %v705, 0.6931472
  %v707 = vlog2.pop %v704
  %v708 = vmul.f32 %v707, 0.6931472
  %v709 = vadd.f32 %v706, %v692
  %v710 = vadd.f32 %v708, %v694
  %v711 = vsub.f32 %v680, %v709
  %v712 = vsub.f32 %v683, %v710
  %713 = vst [vmem:[%s5] sm:$0xff] %v711
  %714 = vst [vmem:[%s5 + $0x8] sm:$0xff] %v712
  // Predicated region
  $region22: #{lenet_forward.5} parent=0 // pred_check
    _
  $region23: #{lenet_forward.5} parent=0 // pred_check_branch
    %716 = sbr.rel (0) target = $region25
  $region24: #{lenet_forward.5} parent=0 // pred_region
    _
  $region25: #{lenet_forward.5} parent=0 // pred_fallthru
    _
  // Predicated region
  $region26: #{lenet_forward.5} parent=0 // pred_check
    _
  $region27: #{lenet_forward.5} parent=0 // pred_check_branch
    %718 = sbr.rel (0) target = $region29
  $region28: #{lenet_forward.5} parent=0 // pred_region
    _
  $region29: #{lenet_forward.5} parent=0 // pred_fallthru
    _

</llo_original>
